<compile_context>
chip_gen: v7x
topology: tpu7x:2x2x1
jax: 0.10.0
libtpu: 0.0.40
codegen_flags: <defaults>
</compile_context>

<pallas_src>
import functools
import math

import jax
import jax.numpy as jnp
from jax.experimental import pallas as pl
from jax.experimental.pallas import tpu as pltpu

_VMEM = pl.BlockSpec(memory_space=pltpu.MemorySpace.VMEM)
_BN_EPS = 1e-5


# ------------------------------ fused kernel ---------------------------------

def _bottle2neck_kernel(x_ref, w1_ref, wc_ref, w3_ref, wse1_ref, wse2_ref,
                        p32_ref, pw_ref, bse1_ref, o_ref,
                        *, dilation, ksz, n_batch, t_len):
    f32, bf16 = jnp.float32, jnp.bfloat16
    nt = x_ref.shape[1]                       # N*T (fused lane axis)
    nums, width, _ = wc_ref.shape
    pad = (ksz // 2) * dilation
    inv_cnt = 1.0 / float(nt)

    def bn(y, gamma, beta):
        # BatchNorm1d training-mode batch stats over (batch, time) == lanes.
        # Two-pass (shifted) variance to avoid E[x^2]-E[x]^2 cancellation.
        mean = y.sum(axis=1, keepdims=True) * inv_cnt
        d = y - mean
        var = (d * d).sum(axis=1, keepdims=True) * inv_cnt
        return d * (jax.lax.rsqrt(var + _BN_EPS) * gamma) + beta

    # ---- packed per-channel params (2 DMAs instead of 13) ------------------
    p32 = p32_ref[...]                        # (scale*width, 7)
    b1, g1, be1 = p32[:, 0:1], p32[:, 1:2], p32[:, 2:3]
    b3, g3, be3 = p32[:, 3:4], p32[:, 4:5], p32[:, 5:6]
    bse2 = p32[:, 6:7]
    pw = pw_ref[...]                          # (width, 3*nums): [bc | gc | bec]

    x_f32 = x_ref[...]                        # (inplanes, N*T), residual path
    x_bf = x_f32.astype(bf16)                 # cast exactly once

    # ---- conv1 (k=1) + ReLU + BN1: one fused MXU matmul --------------------
    h = jnp.dot(w1_ref[...], x_bf, preferred_element_type=f32)
    h = bn(jnp.maximum(h + b1, 0.0), g1, be1)            # (scale*width, N*T)

    # ---- per-tap shift masks: zero-fill at each batch's time edges ---------
    lane_t = jax.lax.broadcasted_iota(jnp.int32, (1, nt), 1) % t_len
    masks = []
    for k in range(ksz):
        off = k * dilation - pad
        if off == 0:
            masks.append(None)
        else:
            m = jnp.logical_and(lane_t + off >= 0, lane_t + off < t_len)
            masks.append(m.astype(f32))

    # ---- Res2 hierarchy: one (width, ksz*width)x(ksz*width, N*T) per chunk -
    chunks = []
    sp = None
    for i in range(nums):
        hi = h[i * width:(i + 1) * width, :]
        sp = hi if i == 0 else sp + hi
        taps = []
        for k in range(ksz):                  # shifted copies built in-register
            off = k * dilation - pad
            if off == 0:
                taps.append(sp)
            else:
                rolled = pltpu.roll(sp, shift=(-off) % nt, axis=1)
                taps.append(rolled * masks[k])
        op = jnp.concatenate(taps, axis=0).astype(bf16)   # (ksz*width, N*T)
        y = jnp.dot(wc_ref[i], op, preferred_element_type=f32)
        y = jnp.maximum(y + pw[:, i:i + 1], 0.0)
        sp = bn(y, pw[:, nums + i:nums + i + 1],
                pw[:, 2 * nums + i:2 * nums + i + 1])
        chunks.append(sp)
    chunks.append(h[nums * width:, :])                    # pass-through chunk

    # ---- conv3 (k=1) + ReLU + BN3 over the concatenated chunks -------------
    cat = jnp.concatenate(chunks, axis=0).astype(bf16)    # (scale*width, N*T)
    y3 = jnp.dot(w3_ref[...], cat, preferred_element_type=f32)
    y3 = bn(jnp.maximum(y3 + b3, 0.0), g3, be3)           # (planes, N*T)

    # ---- SE gate: per-batch mean over T, stacked into (planes, N) ----------
    inv_t = 1.0 / float(t_len)
    s = jnp.concatenate(
        [y3[:, n * t_len:(n + 1) * t_len].sum(axis=1, keepdims=True) * inv_t
         for n in range(n_batch)], axis=1)                 # (planes, N)
    z = jnp.maximum(jnp.dot(wse1_ref[...], s, preferred_element_type=f32)
                    + bse1_ref[...], 0.0)                  # (sebn, N)
    g = jax.nn.sigmoid(jnp.dot(wse2_ref[...], z, preferred_element_type=f32)
                       + bse2)                             # (planes, N)

    # ---- gate + residual; per-batch lane-aligned (planes, T) stores --------
    for n in range(n_batch):
        sl = slice(n * t_len, (n + 1) * t_len)
        o_ref[n] = y3[:, sl] * g[:, n:n + 1] + x_f32[:, sl]


# ------------------------------- wrapper --------------------------------------

@functools.partial(jax.jit, static_argnames=("dilation",))
def bottle2neck_forward(x, params, dilation):
    """Fused Bottle2neck forward.  x: (N, inplanes, T) -> (N, planes, T)."""
    n, cin, t = x.shape
    scale, width, _ = params["w1"].shape
    nums, ksz = params["wc"].shape[:2]
    planes = params["w3"].shape[1]
    sebn = params["wse1"].shape[0]
    assert cin == planes, "residual add requires inplanes == planes"
    assert planes == scale * width, "packing assumes planes == scale*width"
    bf16 = jnp.bfloat16

    # Fused-lane layout: (channels, N*T) -- batch and time on the lane axis.
    xt = jnp.transpose(x, (1, 0, 2)).reshape(cin, n * t)

    # Pre-cast / pre-concatenate weights (bf16 MXU operands, f32 accumulate).
    w1_full = params["w1"].reshape(scale * width, cin).astype(bf16)
    wc_cat = jnp.transpose(params["wc"], (0, 2, 1, 3)).reshape(
        nums, width, ksz * width).astype(bf16)
    w3_full = jnp.transpose(params["w3"], (1, 0, 2)).reshape(
        planes, scale * width).astype(bf16)

    # Pack the tiny per-channel vectors into two VMEM inputs.
    p32 = jnp.concatenate([
        params["b1"].reshape(scale * width, 1),
        params["g1"].reshape(scale * width, 1),
        params["be1"].reshape(scale * width, 1),
        params["b3"], params["g3"], params["be3"], params["bse2"]], axis=1)
    pw = jnp.concatenate([
        params["bc"][:, :, 0].T, params["gc"][:, :, 0].T,
        params["bec"][:, :, 0].T], axis=1)

    flops = 2 * n * t * (scale * width * cin                  # conv1
                         + nums * width * ksz * width         # dilated convs
                         + planes * scale * width)            # conv3
    flops += 4 * n * sebn * planes                            # SE matmuls
    bytes_accessed = 4 * (int(x.size) + n * planes * t
                          + sum(int(v.size)
                                for v in jax.tree_util.tree_leaves(params)))
    cost = pl.CostEstimate(flops=int(flops),
                           transcendentals=int(n * (planes + sebn)),
                           bytes_accessed=int(bytes_accessed))

    return pl.pallas_call(
        functools.partial(_bottle2neck_kernel, dilation=dilation, ksz=ksz,
                          n_batch=n, t_len=t),
        out_shape=jax.ShapeDtypeStruct((n, planes, t), jnp.float32),
        in_specs=[_VMEM] * 9,
        out_specs=_VMEM,
        compiler_params=pltpu.CompilerParams(vmem_limit_bytes=4 * 1024 * 1024),
        cost_estimate=cost,
    )(xt, w1_full, wc_cat, w3_full,
      params["wse1"], params["wse2"], p32, pw, params["bse1"])


# ----------------------------- parameter init ---------------------------------

def make_params(key, inplanes, planes, kernel_size, scale, se_bottleneck=128):
    """Random parameters in kernel-friendly layouts.

    Correspondence with the torch module:
      conv1.weight (W*S, inplanes, 1) -> w1[j]    = weight[j*W:(j+1)*W, :, 0]
      convs[i].weight (W, W, K)       -> wc[i, k] = weight[:, :, k]
      conv3.weight (planes, W*S, 1)   -> w3[j]    = weight[:, j*W:(j+1)*W, 0]
      SE convs (k=1)                  -> wse1/wse2 = weight[:, :, 0]
      BatchNorm: gamma = 1, beta = 0 (freshly constructed module).
    """
    width = planes // scale
    nums = scale - 1
    ks = jax.random.split(key, 10)

    def u(k, shape, fan_in):
        lim = 1.0 / math.sqrt(fan_in)
        return jax.random.uniform(k, shape, jnp.float32, -lim, lim)

    return {
        "w1": u(ks[0], (scale, width, inplanes), inplanes),
        "b1": u(ks[1], (scale, width, 1), inplanes),
        "g1": jnp.ones((scale, width, 1), jnp.float32),
        "be1": jnp.zeros((scale, width, 1), jnp.float32),
        "wc": u(ks[2], (nums, kernel_size, width, width), width * kernel_size),
        "bc": u(ks[3], (nums, width, 1), width * kernel_size),
        "gc": jnp.ones((nums, width, 1), jnp.float32),
        "bec": jnp.zeros((nums, width, 1), jnp.float32),
        "w3": u(ks[4], (scale, planes, width), width * scale),
        "b3": u(ks[5], (planes, 1), width * scale),
        "g3": jnp.ones((planes, 1), jnp.float32),
        "be3": jnp.zeros((planes, 1), jnp.float32),
        "wse1": u(ks[6], (se_bottleneck, planes), planes),
        "bse1": u(ks[7], (se_bottleneck, 1), planes),
        "wse2": u(ks[8], (planes, se_bottleneck), se_bottleneck),
        "bse2": u(ks[9], (planes, 1), se_bottleneck),
    }


# ----------------------- pure-JAX reference (for checking) --------------------

def _bn_ref(y, gamma, beta):
    mean = jnp.mean(y, axis=(0, 2), keepdims=True)
    var = jnp.mean((y - mean) ** 2, axis=(0, 2), keepdims=True)
    return ((y - mean) * jax.lax.rsqrt(var + _BN_EPS)
            * gamma[None, :, None] + beta[None, :, None])


def bottle2neck_reference(x, params, dilation):
    """Mirrors the torch forward; uses the same bf16-operand / f32-accumulate
    matmuls as the kernel so the comparison is tight."""
    n, cin, t = x.shape
    scale, width, _ = params["w1"].shape
    nums, ksz = params["wc"].shape[:2]
    pad = (ksz // 2) * dilation
    bf = jnp.bfloat16

    def pconv(z, w, b):          # k=1 conv, channels-first
        y = jnp.einsum("oc,nct->not", w.astype(bf), z.astype(bf),
                       preferred_element_type=jnp.float32)
        return y + b[None]

    w1 = params["w1"].reshape(scale * width, cin)
    out = jnp.maximum(pconv(x, w1, params["b1"].reshape(scale * width, 1)), 0.0)
    out = _bn_ref(out, params["g1"].reshape(-1), params["be1"].reshape(-1))

    spx = [out[:, j * width:(j + 1) * width, :] for j in range(scale)]
    chunks, sp = [], None
    for i in range(nums):
        sp = spx[i] if i == 0 else sp + spx[i]
        spp = jnp.pad(sp, ((0, 0), (0, 0), (pad, pad)))
        acc = jnp.zeros((n, width, t), jnp.float32)
        for k in range(ksz):
            acc = acc + jnp.einsum(
                "oc,nct->not", params["wc"][i, k].astype(bf),
                spp[:, :, k * dilation:k * dilation + t].astype(bf),
                preferred_element_type=jnp.float32)
        acc = jnp.maximum(acc + params["bc"][i][None], 0.0)
        sp = _bn_ref(acc, params["gc"][i, :, 0], params["bec"][i, :, 0])
        chunks.append(sp)
    chunks.append(spx[nums])
    cat = jnp.concatenate(chunks, axis=1)
    w3 = jnp.concatenate([params["w3"][j] for j in range(scale)], axis=1)
    y3 = jnp.maximum(pconv(cat, w3, params["b3"]), 0.0)
    y3 = _bn_ref(y3, params["g3"][:, 0], params["be3"][:, 0])

    s = jnp.mean(y3, axis=2, keepdims=True)
    z = jnp.maximum(jnp.einsum("oc,nct->not", params["wse1"], s)
                    + params["bse1"][None], 0.0)
    g = jax.nn.sigmoid(jnp.einsum("oc,nct->not", params["wse2"], z)
                       + params["bse2"][None])
    return y3 * g + x


# ---------------------------------- main --------------------------------------

if __name__ == "__main__":
    inplanes = planes = 32            # residual add requires inplanes == planes
    scale, kernel_size, dilation = 4, 3, 2
    batch, t_len = 2, 128             # N*T = 256 lanes, fully lane-dense

    pkey, xkey = jax.random.split(jax.random.PRNGKey(0))
    params = make_params(pkey, inplanes, planes, kernel_size, scale)
    x = jax.random.normal(xkey, (batch, inplanes, t_len), jnp.float32)

    out = bottle2neck_forward(x, params, dilation=dilation)
    out = jax.block_until_ready(out)

    assert out.shape == (batch, planes, t_len), out.shape
    assert bool(jnp.all(jnp.isfinite(out)))

    ref = bottle2neck_reference(x, params, dilation)
    err = float(jnp.max(jnp.abs(out - ref)))
    assert err < 3e-2, f"kernel/reference mismatch: max abs err = {err}"

    print("KERNEL_OK")
</pallas_src>

<mosaic_0001>
module attributes {stable_mosaic.version = 11 : i64} {
  func.func @_bottle2neck_kernel(%arg0: memref<32x256xf32, #tpu.memory_space<vmem>>, %arg1: memref<32x32xbf16, #tpu.memory_space<vmem>>, %arg2: memref<3x8x24xbf16, #tpu.memory_space<vmem>>, %arg3: memref<32x32xbf16, #tpu.memory_space<vmem>>, %arg4: memref<128x32xf32, #tpu.memory_space<vmem>>, %arg5: memref<32x128xf32, #tpu.memory_space<vmem>>, %arg6: memref<32x7xf32, #tpu.memory_space<vmem>>, %arg7: memref<8x9xf32, #tpu.memory_space<vmem>>, %arg8: memref<128x1xf32, #tpu.memory_space<vmem>>, %arg9: memref<2x32x128xf32, #tpu.memory_space<vmem>>) attributes {dimension_semantics = [], scalar_prefetch = 0 : i64, scratch_operands = 0 : i64, tpu.core_type = #tpu.core_type<tc>} {
    %c0 = arith.constant 0 : index
    %c0_0 = arith.constant 0 : index
    %0 = vector.load %arg6[%c0, %c0_0] : memref<32x7xf32, #tpu.memory_space<vmem>>, vector<32x7xf32>
    %1 = vector.extract_strided_slice %0 {offsets = [0, 0], sizes = [32, 1], strides = [1, 1]} : vector<32x7xf32> to vector<32x1xf32>
    %2 = vector.extract_strided_slice %0 {offsets = [0, 1], sizes = [32, 1], strides = [1, 1]} : vector<32x7xf32> to vector<32x1xf32>
    %3 = vector.extract_strided_slice %0 {offsets = [0, 2], sizes = [32, 1], strides = [1, 1]} : vector<32x7xf32> to vector<32x1xf32>
    %4 = vector.extract_strided_slice %0 {offsets = [0, 3], sizes = [32, 1], strides = [1, 1]} : vector<32x7xf32> to vector<32x1xf32>
    %5 = vector.extract_strided_slice %0 {offsets = [0, 4], sizes = [32, 1], strides = [1, 1]} : vector<32x7xf32> to vector<32x1xf32>
    %6 = vector.extract_strided_slice %0 {offsets = [0, 5], sizes = [32, 1], strides = [1, 1]} : vector<32x7xf32> to vector<32x1xf32>
    %7 = vector.extract_strided_slice %0 {offsets = [0, 6], sizes = [32, 1], strides = [1, 1]} : vector<32x7xf32> to vector<32x1xf32>
    %c0_1 = arith.constant 0 : index
    %c0_2 = arith.constant 0 : index
    %8 = vector.load %arg7[%c0_1, %c0_2] : memref<8x9xf32, #tpu.memory_space<vmem>>, vector<8x9xf32>
    %c0_3 = arith.constant 0 : index
    %c0_4 = arith.constant 0 : index
    %9 = vector.load %arg0[%c0_3, %c0_4] : memref<32x256xf32, #tpu.memory_space<vmem>>, vector<32x256xf32>
    %10 = arith.truncf %9 : vector<32x256xf32> to vector<32x256xbf16>
    %c0_5 = arith.constant 0 : index
    %c0_6 = arith.constant 0 : index
    %11 = vector.load %arg1[%c0_5, %c0_6] : memref<32x32xbf16, #tpu.memory_space<vmem>>, vector<32x32xbf16>
    %cst = arith.constant dense<0.000000e+00> : vector<32x256xf32>
    %12 = tpu.matmul %11, %10, %cst {dimension_numbers = #tpu.dot_dimension_numbers<[1], [0], [0], [1], [0, 0, 1, 1], [], []>} : vector<32x32xbf16>, vector<32x256xbf16>, vector<32x256xf32> -> vector<32x256xf32>
    %13 = vector.broadcast %1 : vector<32x1xf32> to vector<32x256xf32>
    %14 = arith.addf %12, %13 : vector<32x256xf32>
    %cst_7 = arith.constant 0.000000e+00 : f32
    %15 = vector.broadcast %cst_7 : f32 to vector<32x256xf32>
    %16 = arith.maximumf %14, %15 : vector<32x256xf32>
    %cst_8 = arith.constant dense<0.000000e+00> : vector<32xf32>
    %17 = vector.multi_reduction <add>, %16, %cst_8 [1] : vector<32x256xf32> to vector<32xf32>
    %18 = vector.shape_cast %17 : vector<32xf32> to vector<32x1xf32>
    %cst_9 = arith.constant 3.906250e-03 : f32
    %19 = vector.broadcast %cst_9 : f32 to vector<32x1xf32>
    %20 = arith.mulf %18, %19 : vector<32x1xf32>
    %21 = vector.broadcast %20 : vector<32x1xf32> to vector<32x256xf32>
    %22 = arith.subf %16, %21 : vector<32x256xf32>
    %23 = arith.mulf %22, %22 : vector<32x256xf32>
    %cst_10 = arith.constant dense<0.000000e+00> : vector<32xf32>
    %24 = vector.multi_reduction <add>, %23, %cst_10 [1] : vector<32x256xf32> to vector<32xf32>
    %25 = vector.shape_cast %24 : vector<32xf32> to vector<32x1xf32>
    %cst_11 = arith.constant 3.906250e-03 : f32
    %26 = vector.broadcast %cst_11 : f32 to vector<32x1xf32>
    %27 = arith.mulf %25, %26 : vector<32x1xf32>
    %cst_12 = arith.constant 9.99999974E-6 : f32
    %28 = vector.broadcast %cst_12 : f32 to vector<32x1xf32>
    %29 = arith.addf %27, %28 : vector<32x1xf32>
    %30 = math.rsqrt %29 : vector<32x1xf32>
    %31 = arith.mulf %30, %2 : vector<32x1xf32>
    %32 = vector.broadcast %31 : vector<32x1xf32> to vector<32x256xf32>
    %33 = arith.mulf %22, %32 : vector<32x256xf32>
    %34 = vector.broadcast %3 : vector<32x1xf32> to vector<32x256xf32>
    %35 = arith.addf %33, %34 : vector<32x256xf32>
    %36 = tpu.iota {dimensions = array<i32: 1>} : vector<1x256xi32>
    %c128_i32 = arith.constant 128 : i32
    %c0_i32 = arith.constant 0 : i32
    %37 = arith.cmpi eq, %c128_i32, %c0_i32 : i32
    %c1_i32 = arith.constant 1 : i32
    %38 = arith.select %37, %c1_i32, %c128_i32 : i32
    %39 = vector.broadcast %38 : i32 to vector<1x256xi32>
    %40 = arith.remsi %36, %39 : vector<1x256xi32>
    %c0_i32_13 = arith.constant 0 : i32
    %41 = vector.broadcast %c0_i32_13 : i32 to vector<1x256xi32>
    %42 = arith.cmpi ne, %40, %41 : vector<1x256xi32>
    %c0_i32_14 = arith.constant 0 : i32
    %43 = vector.broadcast %c0_i32_14 : i32 to vector<1x256xi32>
    %44 = arith.cmpi slt, %40, %43 : vector<1x256xi32>
    %c0_i32_15 = arith.constant 0 : i32
    %45 = arith.cmpi slt, %38, %c0_i32_15 : i32
    %46 = vector.broadcast %45 : i1 to vector<1x256xi1>
    %47 = vector.broadcast %46 : vector<1x256xi1> to vector<1x256xi1>
    %48 = arith.xori %44, %47 : vector<1x256xi1>
    %49 = arith.andi %48, %42 : vector<1x256xi1>
    %50 = vector.broadcast %38 : i32 to vector<1x256xi32>
    %51 = arith.addi %40, %50 : vector<1x256xi32>
    %52 = arith.select %49, %51, %40 : vector<1x256xi1>, vector<1x256xi32>
    %c-2_i32 = arith.constant -2 : i32
    %53 = vector.broadcast %c-2_i32 : i32 to vector<1x256xi32>
    %54 = arith.addi %52, %53 : vector<1x256xi32>
    %c0_i32_16 = arith.constant 0 : i32
    %55 = vector.broadcast %c0_i32_16 : i32 to vector<1x256xi32>
    %56 = arith.cmpi sge, %54, %55 : vector<1x256xi32>
    %c-2_i32_17 = arith.constant -2 : i32
    %57 = vector.broadcast %c-2_i32_17 : i32 to vector<1x256xi32>
    %58 = arith.addi %52, %57 : vector<1x256xi32>
    %c128_i32_18 = arith.constant 128 : i32
    %59 = vector.broadcast %c128_i32_18 : i32 to vector<1x256xi32>
    %60 = arith.cmpi slt, %58, %59 : vector<1x256xi32>
    %61 = arith.andi %56, %60 : vector<1x256xi1>
    %62 = arith.extui %61 : vector<1x256xi1> to vector<1x256xi32>
    %63 = arith.sitofp %62 : vector<1x256xi32> to vector<1x256xf32>
    %c2_i32 = arith.constant 2 : i32
    %64 = vector.broadcast %c2_i32 : i32 to vector<1x256xi32>
    %65 = arith.addi %52, %64 : vector<1x256xi32>
    %c0_i32_19 = arith.constant 0 : i32
    %66 = vector.broadcast %c0_i32_19 : i32 to vector<1x256xi32>
    %67 = arith.cmpi sge, %65, %66 : vector<1x256xi32>
    %c2_i32_20 = arith.constant 2 : i32
    %68 = vector.broadcast %c2_i32_20 : i32 to vector<1x256xi32>
    %69 = arith.addi %52, %68 : vector<1x256xi32>
    %c128_i32_21 = arith.constant 128 : i32
    %70 = vector.broadcast %c128_i32_21 : i32 to vector<1x256xi32>
    %71 = arith.cmpi slt, %69, %70 : vector<1x256xi32>
    %72 = arith.andi %67, %71 : vector<1x256xi1>
    %73 = arith.extui %72 : vector<1x256xi1> to vector<1x256xi32>
    %74 = arith.sitofp %73 : vector<1x256xi32> to vector<1x256xf32>
    %75 = vector.extract_strided_slice %35 {offsets = [0, 0], sizes = [8, 256], strides = [1, 1]} : vector<32x256xf32> to vector<8x256xf32>
    %c2_i32_22 = arith.constant 2 : i32
    %76 = tpu.dynamic_rotate %75 by %c2_i32_22 dim 1 : vector<8x256xf32>, i32 -> vector<8x256xf32>
    %77 = vector.broadcast %63 : vector<1x256xf32> to vector<8x256xf32>
    %78 = arith.mulf %76, %77 : vector<8x256xf32>
    %c254_i32 = arith.constant 254 : i32
    %79 = tpu.dynamic_rotate %75 by %c254_i32 dim 1 : vector<8x256xf32>, i32 -> vector<8x256xf32>
    %80 = vector.broadcast %74 : vector<1x256xf32> to vector<8x256xf32>
    %81 = arith.mulf %79, %80 : vector<8x256xf32>
    %82 = tpu.concatenate %78, %75, %81 in 0 : vector<8x256xf32>, vector<8x256xf32>, vector<8x256xf32> -> vector<24x256xf32>
    %83 = arith.truncf %82 : vector<24x256xf32> to vector<24x256xbf16>
    %c0_23 = arith.constant 0 : index
    %c0_24 = arith.constant 0 : index
    %c0_25 = arith.constant 0 : index
    %84 = vector.load %arg2[%c0_23, %c0_24, %c0_25] : memref<3x8x24xbf16, #tpu.memory_space<vmem>>, vector<1x8x24xbf16>
    %85 = vector.shape_cast %84 : vector<1x8x24xbf16> to vector<8x24xbf16>
    %cst_26 = arith.constant dense<0.000000e+00> : vector<8x256xf32>
    %86 = tpu.matmul %85, %83, %cst_26 {dimension_numbers = #tpu.dot_dimension_numbers<[1], [0], [0], [1], [0, 0, 1, 1], [], []>} : vector<8x24xbf16>, vector<24x256xbf16>, vector<8x256xf32> -> vector<8x256xf32>
    %87 = vector.extract_strided_slice %8 {offsets = [0, 0], sizes = [8, 1], strides = [1, 1]} : vector<8x9xf32> to vector<8x1xf32>
    %88 = vector.broadcast %87 : vector<8x1xf32> to vector<8x256xf32>
    %89 = arith.addf %86, %88 : vector<8x256xf32>
    %cst_27 = arith.constant 0.000000e+00 : f32
    %90 = vector.broadcast %cst_27 : f32 to vector<8x256xf32>
    %91 = arith.maximumf %89, %90 : vector<8x256xf32>
    %92 = vector.extract_strided_slice %8 {offsets = [0, 3], sizes = [8, 1], strides = [1, 1]} : vector<8x9xf32> to vector<8x1xf32>
    %93 = vector.extract_strided_slice %8 {offsets = [0, 6], sizes = [8, 1], strides = [1, 1]} : vector<8x9xf32> to vector<8x1xf32>
    %cst_28 = arith.constant dense<0.000000e+00> : vector<8xf32>
    %94 = vector.multi_reduction <add>, %91, %cst_28 [1] : vector<8x256xf32> to vector<8xf32>
    %95 = vector.shape_cast %94 : vector<8xf32> to vector<8x1xf32>
    %cst_29 = arith.constant 3.906250e-03 : f32
    %96 = vector.broadcast %cst_29 : f32 to vector<8x1xf32>
    %97 = arith.mulf %95, %96 : vector<8x1xf32>
    %98 = vector.broadcast %97 : vector<8x1xf32> to vector<8x256xf32>
    %99 = arith.subf %91, %98 : vector<8x256xf32>
    %100 = arith.mulf %99, %99 : vector<8x256xf32>
    %cst_30 = arith.constant dense<0.000000e+00> : vector<8xf32>
    %101 = vector.multi_reduction <add>, %100, %cst_30 [1] : vector<8x256xf32> to vector<8xf32>
    %102 = vector.shape_cast %101 : vector<8xf32> to vector<8x1xf32>
    %cst_31 = arith.constant 3.906250e-03 : f32
    %103 = vector.broadcast %cst_31 : f32 to vector<8x1xf32>
    %104 = arith.mulf %102, %103 : vector<8x1xf32>
    %cst_32 = arith.constant 9.99999974E-6 : f32
    %105 = vector.broadcast %cst_32 : f32 to vector<8x1xf32>
    %106 = arith.addf %104, %105 : vector<8x1xf32>
    %107 = math.rsqrt %106 : vector<8x1xf32>
    %108 = arith.mulf %107, %92 : vector<8x1xf32>
    %109 = vector.broadcast %108 : vector<8x1xf32> to vector<8x256xf32>
    %110 = arith.mulf %99, %109 : vector<8x256xf32>
    %111 = vector.broadcast %93 : vector<8x1xf32> to vector<8x256xf32>
    %112 = arith.addf %110, %111 : vector<8x256xf32>
    %113 = vector.extract_strided_slice %35 {offsets = [8, 0], sizes = [8, 256], strides = [1, 1]} : vector<32x256xf32> to vector<8x256xf32>
    %114 = arith.addf %112, %113 : vector<8x256xf32>
    %c2_i32_33 = arith.constant 2 : i32
    %115 = tpu.dynamic_rotate %114 by %c2_i32_33 dim 1 : vector<8x256xf32>, i32 -> vector<8x256xf32>
    %116 = vector.broadcast %63 : vector<1x256xf32> to vector<8x256xf32>
    %117 = arith.mulf %115, %116 : vector<8x256xf32>
    %c254_i32_34 = arith.constant 254 : i32
    %118 = tpu.dynamic_rotate %114 by %c254_i32_34 dim 1 : vector<8x256xf32>, i32 -> vector<8x256xf32>
    %119 = vector.broadcast %74 : vector<1x256xf32> to vector<8x256xf32>
    %120 = arith.mulf %118, %119 : vector<8x256xf32>
    %121 = tpu.concatenate %117, %114, %120 in 0 : vector<8x256xf32>, vector<8x256xf32>, vector<8x256xf32> -> vector<24x256xf32>
    %122 = arith.truncf %121 : vector<24x256xf32> to vector<24x256xbf16>
    %c1 = arith.constant 1 : index
    %c0_35 = arith.constant 0 : index
    %c0_36 = arith.constant 0 : index
    %123 = vector.load %arg2[%c1, %c0_35, %c0_36] : memref<3x8x24xbf16, #tpu.memory_space<vmem>>, vector<1x8x24xbf16>
    %124 = vector.shape_cast %123 : vector<1x8x24xbf16> to vector<8x24xbf16>
    %cst_37 = arith.constant dense<0.000000e+00> : vector<8x256xf32>
    %125 = tpu.matmul %124, %122, %cst_37 {dimension_numbers = #tpu.dot_dimension_numbers<[1], [0], [0], [1], [0, 0, 1, 1], [], []>} : vector<8x24xbf16>, vector<24x256xbf16>, vector<8x256xf32> -> vector<8x256xf32>
    %126 = vector.extract_strided_slice %8 {offsets = [0, 1], sizes = [8, 1], strides = [1, 1]} : vector<8x9xf32> to vector<8x1xf32>
    %127 = vector.broadcast %126 : vector<8x1xf32> to vector<8x256xf32>
    %128 = arith.addf %125, %127 : vector<8x256xf32>
    %cst_38 = arith.constant 0.000000e+00 : f32
    %129 = vector.broadcast %cst_38 : f32 to vector<8x256xf32>
    %130 = arith.maximumf %128, %129 : vector<8x256xf32>
    %131 = vector.extract_strided_slice %8 {offsets = [0, 4], sizes = [8, 1], strides = [1, 1]} : vector<8x9xf32> to vector<8x1xf32>
    %132 = vector.extract_strided_slice %8 {offsets = [0, 7], sizes = [8, 1], strides = [1, 1]} : vector<8x9xf32> to vector<8x1xf32>
    %cst_39 = arith.constant dense<0.000000e+00> : vector<8xf32>
    %133 = vector.multi_reduction <add>, %130, %cst_39 [1] : vector<8x256xf32> to vector<8xf32>
    %134 = vector.shape_cast %133 : vector<8xf32> to vector<8x1xf32>
    %cst_40 = arith.constant 3.906250e-03 : f32
    %135 = vector.broadcast %cst_40 : f32 to vector<8x1xf32>
    %136 = arith.mulf %134, %135 : vector<8x1xf32>
    %137 = vector.broadcast %136 : vector<8x1xf32> to vector<8x256xf32>
    %138 = arith.subf %130, %137 : vector<8x256xf32>
    %139 = arith.mulf %138, %138 : vector<8x256xf32>
    %cst_41 = arith.constant dense<0.000000e+00> : vector<8xf32>
    %140 = vector.multi_reduction <add>, %139, %cst_41 [1] : vector<8x256xf32> to vector<8xf32>
    %141 = vector.shape_cast %140 : vector<8xf32> to vector<8x1xf32>
    %cst_42 = arith.constant 3.906250e-03 : f32
    %142 = vector.broadcast %cst_42 : f32 to vector<8x1xf32>
    %143 = arith.mulf %141, %142 : vector<8x1xf32>
    %cst_43 = arith.constant 9.99999974E-6 : f32
    %144 = vector.broadcast %cst_43 : f32 to vector<8x1xf32>
    %145 = arith.addf %143, %144 : vector<8x1xf32>
    %146 = math.rsqrt %145 : vector<8x1xf32>
    %147 = arith.mulf %146, %131 : vector<8x1xf32>
    %148 = vector.broadcast %147 : vector<8x1xf32> to vector<8x256xf32>
    %149 = arith.mulf %138, %148 : vector<8x256xf32>
    %150 = vector.broadcast %132 : vector<8x1xf32> to vector<8x256xf32>
    %151 = arith.addf %149, %150 : vector<8x256xf32>
    %152 = vector.extract_strided_slice %35 {offsets = [16, 0], sizes = [8, 256], strides = [1, 1]} : vector<32x256xf32> to vector<8x256xf32>
    %153 = arith.addf %151, %152 : vector<8x256xf32>
    %c2_i32_44 = arith.constant 2 : i32
    %154 = tpu.dynamic_rotate %153 by %c2_i32_44 dim 1 : vector<8x256xf32>, i32 -> vector<8x256xf32>
    %155 = vector.broadcast %63 : vector<1x256xf32> to vector<8x256xf32>
    %156 = arith.mulf %154, %155 : vector<8x256xf32>
    %c254_i32_45 = arith.constant 254 : i32
    %157 = tpu.dynamic_rotate %153 by %c254_i32_45 dim 1 : vector<8x256xf32>, i32 -> vector<8x256xf32>
    %158 = vector.broadcast %74 : vector<1x256xf32> to vector<8x256xf32>
    %159 = arith.mulf %157, %158 : vector<8x256xf32>
    %160 = tpu.concatenate %156, %153, %159 in 0 : vector<8x256xf32>, vector<8x256xf32>, vector<8x256xf32> -> vector<24x256xf32>
    %161 = arith.truncf %160 : vector<24x256xf32> to vector<24x256xbf16>
    %c2 = arith.constant 2 : index
    %c0_46 = arith.constant 0 : index
    %c0_47 = arith.constant 0 : index
    %162 = vector.load %arg2[%c2, %c0_46, %c0_47] : memref<3x8x24xbf16, #tpu.memory_space<vmem>>, vector<1x8x24xbf16>
    %163 = vector.shape_cast %162 : vector<1x8x24xbf16> to vector<8x24xbf16>
    %cst_48 = arith.constant dense<0.000000e+00> : vector<8x256xf32>
    %164 = tpu.matmul %163, %161, %cst_48 {dimension_numbers = #tpu.dot_dimension_numbers<[1], [0], [0], [1], [0, 0, 1, 1], [], []>} : vector<8x24xbf16>, vector<24x256xbf16>, vector<8x256xf32> -> vector<8x256xf32>
    %165 = vector.extract_strided_slice %8 {offsets = [0, 2], sizes = [8, 1], strides = [1, 1]} : vector<8x9xf32> to vector<8x1xf32>
    %166 = vector.broadcast %165 : vector<8x1xf32> to vector<8x256xf32>
    %167 = arith.addf %164, %166 : vector<8x256xf32>
    %cst_49 = arith.constant 0.000000e+00 : f32
    %168 = vector.broadcast %cst_49 : f32 to vector<8x256xf32>
    %169 = arith.maximumf %167, %168 : vector<8x256xf32>
    %170 = vector.extract_strided_slice %8 {offsets = [0, 5], sizes = [8, 1], strides = [1, 1]} : vector<8x9xf32> to vector<8x1xf32>
    %171 = vector.extract_strided_slice %8 {offsets = [0, 8], sizes = [8, 1], strides = [1, 1]} : vector<8x9xf32> to vector<8x1xf32>
    %cst_50 = arith.constant dense<0.000000e+00> : vector<8xf32>
    %172 = vector.multi_reduction <add>, %169, %cst_50 [1] : vector<8x256xf32> to vector<8xf32>
    %173 = vector.shape_cast %172 : vector<8xf32> to vector<8x1xf32>
    %cst_51 = arith.constant 3.906250e-03 : f32
    %174 = vector.broadcast %cst_51 : f32 to vector<8x1xf32>
    %175 = arith.mulf %173, %174 : vector<8x1xf32>
    %176 = vector.broadcast %175 : vector<8x1xf32> to vector<8x256xf32>
    %177 = arith.subf %169, %176 : vector<8x256xf32>
    %178 = arith.mulf %177, %177 : vector<8x256xf32>
    %cst_52 = arith.constant dense<0.000000e+00> : vector<8xf32>
    %179 = vector.multi_reduction <add>, %178, %cst_52 [1] : vector<8x256xf32> to vector<8xf32>
    %180 = vector.shape_cast %179 : vector<8xf32> to vector<8x1xf32>
    %cst_53 = arith.constant 3.906250e-03 : f32
    %181 = vector.broadcast %cst_53 : f32 to vector<8x1xf32>
    %182 = arith.mulf %180, %181 : vector<8x1xf32>
    %cst_54 = arith.constant 9.99999974E-6 : f32
    %183 = vector.broadcast %cst_54 : f32 to vector<8x1xf32>
    %184 = arith.addf %182, %183 : vector<8x1xf32>
    %185 = math.rsqrt %184 : vector<8x1xf32>
    %186 = arith.mulf %185, %170 : vector<8x1xf32>
    %187 = vector.broadcast %186 : vector<8x1xf32> to vector<8x256xf32>
    %188 = arith.mulf %177, %187 : vector<8x256xf32>
    %189 = vector.broadcast %171 : vector<8x1xf32> to vector<8x256xf32>
    %190 = arith.addf %188, %189 : vector<8x256xf32>
    %191 = vector.extract_strided_slice %35 {offsets = [24, 0], sizes = [8, 256], strides = [1, 1]} : vector<32x256xf32> to vector<8x256xf32>
    %192 = tpu.concatenate %112, %151, %190, %191 in 0 : vector<8x256xf32>, vector<8x256xf32>, vector<8x256xf32>, vector<8x256xf32> -> vector<32x256xf32>
    %193 = arith.truncf %192 : vector<32x256xf32> to vector<32x256xbf16>
    %c0_55 = arith.constant 0 : index
    %c0_56 = arith.constant 0 : index
    %194 = vector.load %arg3[%c0_55, %c0_56] : memref<32x32xbf16, #tpu.memory_space<vmem>>, vector<32x32xbf16>
    %cst_57 = arith.constant dense<0.000000e+00> : vector<32x256xf32>
    %195 = tpu.matmul %194, %193, %cst_57 {dimension_numbers = #tpu.dot_dimension_numbers<[1], [0], [0], [1], [0, 0, 1, 1], [], []>} : vector<32x32xbf16>, vector<32x256xbf16>, vector<32x256xf32> -> vector<32x256xf32>
    %196 = vector.broadcast %4 : vector<32x1xf32> to vector<32x256xf32>
    %197 = arith.addf %195, %196 : vector<32x256xf32>
    %cst_58 = arith.constant 0.000000e+00 : f32
    %198 = vector.broadcast %cst_58 : f32 to vector<32x256xf32>
    %199 = arith.maximumf %197, %198 : vector<32x256xf32>
    %cst_59 = arith.constant dense<0.000000e+00> : vector<32xf32>
    %200 = vector.multi_reduction <add>, %199, %cst_59 [1] : vector<32x256xf32> to vector<32xf32>
    %201 = vector.shape_cast %200 : vector<32xf32> to vector<32x1xf32>
    %cst_60 = arith.constant 3.906250e-03 : f32
    %202 = vector.broadcast %cst_60 : f32 to vector<32x1xf32>
    %203 = arith.mulf %201, %202 : vector<32x1xf32>
    %204 = vector.broadcast %203 : vector<32x1xf32> to vector<32x256xf32>
    %205 = arith.subf %199, %204 : vector<32x256xf32>
    %206 = arith.mulf %205, %205 : vector<32x256xf32>
    %cst_61 = arith.constant dense<0.000000e+00> : vector<32xf32>
    %207 = vector.multi_reduction <add>, %206, %cst_61 [1] : vector<32x256xf32> to vector<32xf32>
    %208 = vector.shape_cast %207 : vector<32xf32> to vector<32x1xf32>
    %cst_62 = arith.constant 3.906250e-03 : f32
    %209 = vector.broadcast %cst_62 : f32 to vector<32x1xf32>
    %210 = arith.mulf %208, %209 : vector<32x1xf32>
    %cst_63 = arith.constant 9.99999974E-6 : f32
    %211 = vector.broadcast %cst_63 : f32 to vector<32x1xf32>
    %212 = arith.addf %210, %211 : vector<32x1xf32>
    %213 = math.rsqrt %212 : vector<32x1xf32>
    %214 = arith.mulf %213, %5 : vector<32x1xf32>
    %215 = vector.broadcast %214 : vector<32x1xf32> to vector<32x256xf32>
    %216 = arith.mulf %205, %215 : vector<32x256xf32>
    %217 = vector.broadcast %6 : vector<32x1xf32> to vector<32x256xf32>
    %218 = arith.addf %216, %217 : vector<32x256xf32>
    %219 = vector.extract_strided_slice %218 {offsets = [0, 0], sizes = [32, 128], strides = [1, 1]} : vector<32x256xf32> to vector<32x128xf32>
    %cst_64 = arith.constant dense<0.000000e+00> : vector<32xf32>
    %220 = vector.multi_reduction <add>, %219, %cst_64 [1] : vector<32x128xf32> to vector<32xf32>
    %221 = vector.shape_cast %220 : vector<32xf32> to vector<32x1xf32>
    %cst_65 = arith.constant 7.812500e-03 : f32
    %222 = vector.broadcast %cst_65 : f32 to vector<32x1xf32>
    %223 = arith.mulf %221, %222 : vector<32x1xf32>
    %224 = vector.extract_strided_slice %218 {offsets = [0, 128], sizes = [32, 128], strides = [1, 1]} : vector<32x256xf32> to vector<32x128xf32>
    %cst_66 = arith.constant dense<0.000000e+00> : vector<32xf32>
    %225 = vector.multi_reduction <add>, %224, %cst_66 [1] : vector<32x128xf32> to vector<32xf32>
    %226 = vector.shape_cast %225 : vector<32xf32> to vector<32x1xf32>
    %cst_67 = arith.constant 7.812500e-03 : f32
    %227 = vector.broadcast %cst_67 : f32 to vector<32x1xf32>
    %228 = arith.mulf %226, %227 : vector<32x1xf32>
    %229 = tpu.concatenate %223, %228 in 1 : vector<32x1xf32>, vector<32x1xf32> -> vector<32x2xf32>
    %c0_68 = arith.constant 0 : index
    %c0_69 = arith.constant 0 : index
    %230 = vector.load %arg4[%c0_68, %c0_69] : memref<128x32xf32, #tpu.memory_space<vmem>>, vector<128x32xf32>
    %cst_70 = arith.constant dense<0.000000e+00> : vector<128x2xf32>
    %231 = tpu.matmul %230, %229, %cst_70 {dimension_numbers = #tpu.dot_dimension_numbers<[1], [0], [0], [1], [0, 0, 1, 1], [], []>} : vector<128x32xf32>, vector<32x2xf32>, vector<128x2xf32> -> vector<128x2xf32>
    %c0_71 = arith.constant 0 : index
    %c0_72 = arith.constant 0 : index
    %232 = vector.load %arg8[%c0_71, %c0_72] : memref<128x1xf32, #tpu.memory_space<vmem>>, vector<128x1xf32>
    %233 = vector.broadcast %232 : vector<128x1xf32> to vector<128x2xf32>
    %234 = arith.addf %231, %233 : vector<128x2xf32>
    %cst_73 = arith.constant 0.000000e+00 : f32
    %235 = vector.broadcast %cst_73 : f32 to vector<128x2xf32>
    %236 = arith.maximumf %234, %235 : vector<128x2xf32>
    %c0_74 = arith.constant 0 : index
    %c0_75 = arith.constant 0 : index
    %237 = vector.load %arg5[%c0_74, %c0_75] : memref<32x128xf32, #tpu.memory_space<vmem>>, vector<32x128xf32>
    %cst_76 = arith.constant dense<0.000000e+00> : vector<32x2xf32>
    %238 = tpu.matmul %237, %236, %cst_76 {dimension_numbers = #tpu.dot_dimension_numbers<[1], [0], [0], [1], [0, 0, 1, 1], [], []>} : vector<32x128xf32>, vector<128x2xf32>, vector<32x2xf32> -> vector<32x2xf32>
    %239 = vector.broadcast %7 : vector<32x1xf32> to vector<32x2xf32>
    %240 = arith.addf %238, %239 : vector<32x2xf32>
    %241 = arith.negf %240 : vector<32x2xf32>
    %242 = math.exp %241 : vector<32x2xf32>
    %cst_77 = arith.constant 1.000000e+00 : f32
    %243 = vector.broadcast %cst_77 : f32 to vector<32x2xf32>
    %244 = arith.addf %243, %242 : vector<32x2xf32>
    %245 = arith.divf %243, %244 : vector<32x2xf32>
    %246 = vector.extract_strided_slice %218 {offsets = [0, 0], sizes = [32, 128], strides = [1, 1]} : vector<32x256xf32> to vector<32x128xf32>
    %247 = vector.extract_strided_slice %245 {offsets = [0, 0], sizes = [32, 1], strides = [1, 1]} : vector<32x2xf32> to vector<32x1xf32>
    %248 = vector.broadcast %247 : vector<32x1xf32> to vector<32x128xf32>
    %249 = arith.mulf %246, %248 : vector<32x128xf32>
    %250 = vector.extract_strided_slice %9 {offsets = [0, 0], sizes = [32, 128], strides = [1, 1]} : vector<32x256xf32> to vector<32x128xf32>
    %251 = arith.addf %249, %250 : vector<32x128xf32>
    %c0_78 = arith.constant 0 : index
    %c0_79 = arith.constant 0 : index
    %c0_80 = arith.constant 0 : index
    %252 = vector.load %arg9[%c0_78, %c0_79, %c0_80] : memref<2x32x128xf32, #tpu.memory_space<vmem>>, vector<1x32x128xf32>
    %253 = vector.shape_cast %252 : vector<1x32x128xf32> to vector<32x128xf32>
    %254 = vector.shape_cast %251 : vector<32x128xf32> to vector<1x32x128xf32>
    tpu.vector_store %arg9[%c0_78, %c0_79, %c0_80], %254 {strides = array<i32>} : memref<2x32x128xf32, #tpu.memory_space<vmem>>, vector<1x32x128xf32>,
    %255 = vector.extract_strided_slice %218 {offsets = [0, 128], sizes = [32, 128], strides = [1, 1]} : vector<32x256xf32> to vector<32x128xf32>
    %256 = vector.extract_strided_slice %245 {offsets = [0, 1], sizes = [32, 1], strides = [1, 1]} : vector<32x2xf32> to vector<32x1xf32>
    %257 = vector.broadcast %256 : vector<32x1xf32> to vector<32x128xf32>
    %258 = arith.mulf %255, %257 : vector<32x128xf32>
    %259 = vector.extract_strided_slice %9 {offsets = [0, 128], sizes = [32, 128], strides = [1, 1]} : vector<32x256xf32> to vector<32x128xf32>
    %260 = arith.addf %258, %259 : vector<32x128xf32>
    %c1_81 = arith.constant 1 : index
    %c0_82 = arith.constant 0 : index
    %c0_83 = arith.constant 0 : index
    %261 = vector.load %arg9[%c1_81, %c0_82, %c0_83] : memref<2x32x128xf32, #tpu.memory_space<vmem>>, vector<1x32x128xf32>
    %262 = vector.shape_cast %261 : vector<1x32x128xf32> to vector<32x128xf32>
    %263 = vector.shape_cast %260 : vector<32x128xf32> to vector<1x32x128xf32>
    tpu.vector_store %arg9[%c1_81, %c0_82, %c0_83], %263 {strides = array<i32>} : memref<2x32x128xf32, #tpu.memory_space<vmem>>, vector<1x32x128xf32>,
    return
  }
}

</mosaic_0001>

<llo_original>
// kernel: bottle2neck_forward.1
$region0: #{bottle2neck_forward.1}
  #allocation0 [shape = 'u32[]', space=smem, size = 0x4, offset = 0x4, fixed_abs, tag = 'smem constant byte address 0x4 - core index']
  #allocation1 [shape = 'u32[144,128]{1,0:T(1,128)}', space=vmem, size = 0x12000, scoped, tag = 'internal scratch']
  %s0 = inlined_call_operand.vmem [shape: f32[32,256], index: 0, kind: input, shape index: {}]
  %s1 = inlined_call_operand.vmem [shape: bf16[32,32], index: 1, kind: input, shape index: {}]
  %s2 = inlined_call_operand.vmem [shape: bf16[3,8,24], index: 2, kind: input, shape index: {}]
  %s3 = inlined_call_operand.vmem [shape: bf16[32,32], index: 3, kind: input, shape index: {}]
  %s4 = inlined_call_operand.vmem [shape: f32[128,32], index: 4, kind: input, shape index: {}]
  %s5 = inlined_call_operand.vmem [shape: f32[32,128], index: 5, kind: input, shape index: {}]
  %s6 = inlined_call_operand.vmem [shape: f32[32,7], index: 6, kind: input, shape index: {}]
  %s7 = inlined_call_operand.vmem [shape: f32[8,9], index: 7, kind: input, shape index: {}]
  %s8 = inlined_call_operand.vmem [shape: f32[128,1], index: 8, kind: input, shape index: {}]
  %s9 = inlined_call_operand.hbm [shape: f32[2,32,128], index: 9, kind: output, shape index: {}]
  %s10 = sld [smem:[#allocation0]]
  $region46: #{bottle2neck_forward.1} parent=0
    _
  %s12 = ssub.s32 1, %s10
  %s13 = scalar_select 0, %s12, %s10
  $region1: #{bottle2neck_forward.1} parent=0
    #allocation2 [shape = 'u8[32768]{0}', space=vmem, size = 0x8000, scoped, tag = 'output window, operand 0, single buffered']
    #allocation3 [shape = 's32[1]{0}', space=sflag, size = 0x4, scoped, tag = 'scoped memory for bottle2neck_forward.1']
    %14 = vsyncpa [#allocation3], 0
    // Predicated region
    $region2: #{bottle2neck_forward.1} parent=1 // pred_check
      _
    $region3: #{bottle2neck_forward.1} parent=1 // pred_check_branch
      %16 = sbr.rel (0) target = $region5
    $region4: #{bottle2neck_forward.1} parent=1 // pred_region
      _
    $region5: #{bottle2neck_forward.1} parent=1 // pred_fallthru
      _
    // Predicated region
    $region6: #{bottle2neck_forward.1} parent=1 // pred_check
      _
    $region7: #{bottle2neck_forward.1} parent=1 // pred_check_branch
      %18 = sbr.rel (0) target = $region9
    $region8: #{bottle2neck_forward.1} parent=1 // pred_region
      _
    $region9: #{bottle2neck_forward.1} parent=1 // pred_fallthru
      _
    // Predicated region
    $region10: #{bottle2neck_forward.1} parent=1 // pred_check
      _
    $region11: #{bottle2neck_forward.1} parent=1 // pred_check_branch
      %20 = sbr.rel (0) target = $region13
    $region12: #{bottle2neck_forward.1} parent=1 // pred_region
      _
    $region13: #{bottle2neck_forward.1} parent=1 // pred_fallthru
      _
    // Predicated region
    $region14: #{bottle2neck_forward.1} parent=1 // pred_check
      _
    $region15: #{bottle2neck_forward.1} parent=1 // pred_check_branch
      %22 = sbr.rel (0) target = $region17
    $region16: #{bottle2neck_forward.1} parent=1 // pred_region
      _
    $region17: #{bottle2neck_forward.1} parent=1 // pred_fallthru
      _
    // Predicated region
    $region18: #{bottle2neck_forward.1} parent=1 // pred_check
      _
    $region19: #{bottle2neck_forward.1} parent=1 // pred_check_branch
      %24 = sbr.rel (0) target = $region21
    $region20: #{bottle2neck_forward.1} parent=1 // pred_region
      _
    $region21: #{bottle2neck_forward.1} parent=1 // pred_fallthru
      _
    // Predicated region
    $region22: #{bottle2neck_forward.1} parent=1 // pred_check
      _
    $region23: #{bottle2neck_forward.1} parent=1 // pred_check_branch
      %26 = sbr.rel (0) target = $region25
    $region24: #{bottle2neck_forward.1} parent=1 // pred_region
      _
    $region25: #{bottle2neck_forward.1} parent=1 // pred_fallthru
      _
    // Predicated region
    $region26: #{bottle2neck_forward.1} parent=1 // pred_check
      _
    $region27: #{bottle2neck_forward.1} parent=1 // pred_check_branch
      %28 = sbr.rel (0) target = $region29
    $region28: #{bottle2neck_forward.1} parent=1 // pred_region
      _
    $region29: #{bottle2neck_forward.1} parent=1 // pred_fallthru
      _
    // Predicated region
    $region30: #{bottle2neck_forward.1} parent=1 // pred_check
      _
    $region31: #{bottle2neck_forward.1} parent=1 // pred_check_branch
      %30 = sbr.rel (0) target = $region33
    $region32: #{bottle2neck_forward.1} parent=1 // pred_region
      _
    $region33: #{bottle2neck_forward.1} parent=1 // pred_fallthru
      _
    // Predicated region
    $region34: #{bottle2neck_forward.1} parent=1 // pred_check
      _
    $region35: #{bottle2neck_forward.1} parent=1 // pred_check_branch
      %32 = sbr.rel (0) target = $region37
    $region36: #{bottle2neck_forward.1} parent=1 // pred_region
      _
    $region37: #{bottle2neck_forward.1} parent=1 // pred_fallthru
      _
    %v34 = vld [vmem:[%s6] sm:$0xff]
    %v35 = vld [vmem:[%s6 + $0x8] sm:$0xff]
    %v36 = vld [vmem:[%s6 + $0x10] sm:$0xff]
    %v37 = vld [vmem:[%s6 + $0x18] sm:$0xff]
    %v38 = vld [vmem:[%s7] sm:$0xff]
    %v39 = vld [vmem:[%s0] sm:$0xff]
    %v40 = vld [vmem:[%s0 + $0x8] sm:$0xff]
    %v41 = vld [vmem:[%s0 + $0x10] sm:$0xff]
    %v42 = vld [vmem:[%s0 + $0x18] sm:$0xff]
    %v43 = vld [vmem:[%s0 + $0x20] sm:$0xff]
    %v44 = vld [vmem:[%s0 + $0x28] sm:$0xff]
    %v45 = vld [vmem:[%s0 + $0x30] sm:$0xff]
    %v46 = vld [vmem:[%s0 + $0x38] sm:$0xff]
    %v47 = vpack.c.bf16 %v41, %v39
    %v48 = vpack.c.bf16 %v42, %v40
    %v49 = vpack.c.bf16 %v45, %v43
    %v50 = vpack.c.bf16 %v46, %v44
    %v51 = vld [vmem:[%s1] sm:$0xf]
    %v52 = vld [vmem:[%s1 + $0x4] sm:$0xf]
    %v53 = vld [vmem:[%s1 + $0x8] sm:$0xf]
    %v54 = vld [vmem:[%s1 + $0xc] sm:$0xf]
    %56 = vset.pattern.permute.xlu0 0
    %57 = vperm.xlu0 %56, %v34
    %v58 = vpop.permute.xlu0 %57
    %61 = vset.pattern.permute.xlu0 0
    %62 = vperm.xlu0 %61, %v35
    %v63 = vpop.permute.xlu0 %62
    %66 = vset.pattern.permute.xlu0 0
    %67 = vperm.xlu0 %66, %v36
    %v68 = vpop.permute.xlu0 %67
    %71 = vset.pattern.permute.xlu0 0
    %72 = vperm.xlu0 %71, %v37
    %v73 = vpop.permute.xlu0 %72
    %v79 = vunpack.c.l.b16 %v51
    %v80 = vunpack.c.l.b16 %v52
    %v81 = vunpack.c.l.b16 %v53
    %v82 = vunpack.c.l.b16 %v54
    %v83 = vpack.c.b16 %v80, %v79
    %v84 = vpack.c.b16 %v82, %v81
    %vm85 = vcmask 261120
    %v87 = vsel %vm85, %v83, 0
    %v90 = vsel %vm85, %v84, 0
    %92 = vmatprep.subr.bf16.mxu0 %v48
    %93 = vmatpush1.bf16.msra.mxu0 %v47
    %94 = vmatprep.subr.bf16.mxu0 %v50
    %95 = vmatpush1.bf16.msra.mxu0 %v49
    %96 = vmatprep.subr.bf16.mxu0 0
    %97 = vmatpush1.bf16.msra.mxu0 0
    %98 = vmatprep.subr.bf16.mxu0 0
    %99 = vmatpush1.bf16.msra.mxu0 0
    %100 = vmatprep.subr.bf16.mxu0 0
    %101 = vmatpush1.bf16.msra.mxu0 0
    %102 = vmatprep.subr.bf16.mxu0 0
    %103 = vmatpush1.bf16.msra.mxu0 0
    %104 = vmatprep.subr.bf16.mxu0 0
    %105 = vmatpush1.bf16.msra.mxu0 0
    %106 = vmatprep.subr.bf16.mxu0 0
    %107 = vmatpush1.bf16.msra.mxu0 0
    %108 = vmatprep.subr.bf16.mxu0 0
    %109 = vmatpush1.bf16.msra.mxu0 0
    %110 = vmatprep.subr.bf16.mxu0 0
    %111 = vmatpush1.bf16.msra.mxu0 0
    %112 = vmatprep.subr.bf16.mxu0 0
    %113 = vmatpush1.bf16.msra.mxu0 0
    %114 = vmatprep.subr.bf16.mxu0 0
    %115 = vmatpush1.bf16.msra.mxu0 0
    %116 = vmatprep.subr.bf16.mxu0 0
    %117 = vmatpush1.bf16.msra.mxu0 0
    %118 = vmatprep.subr.bf16.mxu0 0
    %119 = vmatpush1.bf16.msra.mxu0 0
    %120 = vmatprep.subr.bf16.mxu0 0
    %121 = vmatpush1.bf16.msra.mxu0 0
    %122 = vmatprep.subr.bf16.mxu0 0
    %123 = vmatpush1.bf16.msra.mxu0 0
    %124 = vmatprep.mubr.bf16.mxu0 0
    %125 = vmatmul.mubr.bf16.gmra.mrb[0].mxu0 %v87
    %v126 = vpop.f32.mrb[0].mxu0
    %v127 = vadd.f32 %v58, %v126
    %v128 = vpop.f32.mrb[0].mxu0
    %v129 = vadd.f32 %v58, %v128
    %v130 = vpop.f32.mrb[0].mxu0
    %v131 = vadd.f32 %v63, %v130
    %v132 = vpop.f32.mrb[0].mxu0
    %v133 = vadd.f32 %v63, %v132
    %134 = vmatprep.mubr.bf16.mxu0 0
    %135 = vmatmul.mubr.bf16.gmra.mrb[0].mxu0 %v90
    %v136 = vpop.f32.mrb[0].mxu0
    %v137 = vadd.f32 %v68, %v136
    %v138 = vpop.f32.mrb[0].mxu0
    %v139 = vadd.f32 %v68, %v138
    %v140 = vpop.f32.mrb[0].mxu0
    %v141 = vadd.f32 %v73, %v140
    %v142 = vpop.f32.mrb[0].mxu0
    %v143 = vadd.f32 %v73, %v142
    %144 = vdwg.mxu0
    %v145 = vmax.f32 %v127, 0.0
    %v146 = vmax.f32 %v129, 0.0
    %v147 = vmax.f32 %v131, 0.0
    %v148 = vmax.f32 %v133, 0.0
    %v149 = vmax.f32 %v137, 0.0
    %v150 = vmax.f32 %v139, 0.0
    %v151 = vmax.f32 %v141, 0.0
    %v152 = vmax.f32 %v143, 0.0
    %v153 = vadd.f32 %v145, %v146
    %154 = vadd.xlane.f32.xlu0 %v153
    %v155 = vpop.xlane.xlu0 %154
    %v156 = vadd.f32 %v147, %v148
    %157 = vadd.xlane.f32.xlu0 %v156
    %v158 = vpop.xlane.xlu0 %157
    %v159 = vadd.f32 %v149, %v150
    %160 = vadd.xlane.f32.xlu0 %v159
    %v161 = vpop.xlane.xlu0 %160
    %v162 = vadd.f32 %v151, %v152
    %163 = vadd.xlane.f32.xlu0 %v162
    %v164 = vpop.xlane.xlu0 %163
    %v165 = vmul.f32 %v155, 0.00390625
    %v166 = vmul.f32 %v158, 0.00390625
    %v167 = vmul.f32 %v161, 0.00390625
    %v168 = vmul.f32 %v164, 0.00390625
    %v169 = vsub.f32 %v145, %v165
    %v170 = vsub.f32 %v146, %v165
    %v171 = vsub.f32 %v147, %v166
    %v172 = vsub.f32 %v148, %v166
    %v173 = vsub.f32 %v149, %v167
    %v174 = vsub.f32 %v150, %v167
    %v175 = vsub.f32 %v151, %v168
    %v176 = vsub.f32 %v152, %v168
    %v177 = vmul.f32 %v169, %v169
    %v178 = vmul.f32 %v170, %v170
    %v179 = vmul.f32 %v171, %v171
    %v180 = vmul.f32 %v172, %v172
    %v181 = vmul.f32 %v173, %v173
    %v182 = vmul.f32 %v174, %v174
    %v183 = vmul.f32 %v175, %v175
    %v184 = vmul.f32 %v176, %v176
    %v185 = vadd.f32 %v177, %v178
    %186 = vadd.xlane.f32.xlu0 %v185
    %v187 = vpop.xlane.xlu0 %186
    %v188 = vadd.f32 %v179, %v180
    %189 = vadd.xlane.f32.xlu0 %v188
    %v190 = vpop.xlane.xlu0 %189
    %v191 = vadd.f32 %v181, %v182
    %192 = vadd.xlane.f32.xlu0 %v191
    %v193 = vpop.xlane.xlu0 %192
    %v194 = vadd.f32 %v183, %v184
    %195 = vadd.xlane.f32.xlu0 %v194
    %v196 = vpop.xlane.xlu0 %195
    %v197 = vmul.f32 %v187, 0.00390625
    %v198 = vmul.f32 %v190, 0.00390625
    %v199 = vmul.f32 %v193, 0.00390625
    %v200 = vmul.f32 %v196, 0.00390625
    %v201 = vadd.f32 %v197, 1e-05
    %v202 = vadd.f32 %v198, 1e-05
    %v203 = vadd.f32 %v199, 1e-05
    %v204 = vadd.f32 %v200, 1e-05
    %v205 = vrsqrt.pop %v201
    %v206 = vrsqrt.pop %v202
    %v207 = vrsqrt.pop %v203
    %v208 = vrsqrt.pop %v204
    %v209 = vmul.f32 %v205, %v34
    %v210 = vmul.f32 %v206, %v35
    %v211 = vmul.f32 %v207, %v36
    %v212 = vmul.f32 %v208, %v37
    %214 = vset.pattern.permute.xlu0 1
    %215 = vperm.xlu0 %214, %v209
    %v216 = vpop.permute.xlu0 %215
    %219 = vset.pattern.permute.xlu0 1
    %220 = vperm.xlu0 %219, %v210
    %v221 = vpop.permute.xlu0 %220
    %224 = vset.pattern.permute.xlu0 1
    %225 = vperm.xlu0 %224, %v211
    %v226 = vpop.permute.xlu0 %225
    %229 = vset.pattern.permute.xlu0 1
    %230 = vperm.xlu0 %229, %v212
    %v231 = vpop.permute.xlu0 %230
    %v233 = vmul.f32 %v169, %v216
    %v234 = vmul.f32 %v170, %v216
    %v235 = vmul.f32 %v171, %v221
    %v236 = vmul.f32 %v172, %v221
    %v237 = vmul.f32 %v173, %v226
    %v238 = vmul.f32 %v174, %v226
    %v239 = vmul.f32 %v175, %v231
    %v240 = vmul.f32 %v176, %v231
    %241 = vset.pattern.permute.xlu0 2
    %242 = vperm.xlu0 %241, %v34
    %v243 = vpop.permute.xlu0 %242
    %245 = vset.pattern.permute.xlu0 2
    %246 = vperm.xlu0 %245, %v35
    %v247 = vpop.permute.xlu0 %246
    %249 = vset.pattern.permute.xlu0 2
    %250 = vperm.xlu0 %249, %v36
    %v251 = vpop.permute.xlu0 %250
    %253 = vset.pattern.permute.xlu0 2
    %254 = vperm.xlu0 %253, %v37
    %v255 = vpop.permute.xlu0 %254
    %v257 = vadd.f32 %v233, %v243
    %v258 = vadd.f32 %v234, %v243
    %v259 = vadd.f32 %v235, %v247
    %v260 = vadd.f32 %v236, %v247
    %v261 = vadd.f32 %v237, %v251
    %v262 = vadd.f32 %v238, %v251
    %v263 = vadd.f32 %v239, %v255
    %v264 = vadd.f32 %v240, %v255
    %v265 = vlaneseq
    %v266 = vand.u32 %v265, 127
    %v267 = vadd.s32 %v266, 128
    %vm268 = vcmp.lt.s32.totalorder %v266, 0
    %v269 = vsub.s32 0, %v266
    %v270 = vsel %vm268, %v269, %v266
    %v271 = vshrl.u32 %v270, 7
    %v272 = vand.u32 %v270, 127
    %v273 = vsub.s32 0, %v272
    %v274 = vsel %vm268, %v273, %v272
    %vm275 = vcmp.lt.s32.totalorder %v267, 0
    %v276 = vsub.s32 0, %v267
    %v277 = vsel %vm275, %v276, %v267
    %v278 = vshrl.u32 %v277, 7
    %v279 = vand.u32 %v277, 127
    %v280 = vsub.s32 0, %v279
    %v281 = vsel %vm275, %v280, %v279
    %vm282 = vcmp.ne.s32.totalorder %v274, 0
    %vm283 = vcmp.ne.s32.totalorder %v281, 0
    %vm284 = vcmp.lt.s32.totalorder %v274, 0
    %vm285 = vcmp.lt.s32.totalorder %v281, 0
    %vm286 = vmand %vm284, %vm282
    %vm287 = vmand %vm285, %vm283
    %v288 = vadd.s32 %v274, 128
    %v289 = vadd.s32 %v281, 128
    %v290 = vsel %vm286, %v288, %v274
    %v291 = vsel %vm287, %v289, %v281
    %v292 = vadd.s32 %v290, 4294967294
    %v293 = vadd.s32 %v291, 4294967294
    %vm294 = vcmp.ge.s32.totalorder %v292, 0
    %vm295 = vcmp.ge.s32.totalorder %v293, 0
    %vm296 = vcmp.lt.s32.totalorder %v292, 128
    %vm297 = vcmp.lt.s32.totalorder %v293, 128
    %vm298 = vmand %vm294, %vm296
    %vm299 = vmand %vm295, %vm297
    %v300 = vsel %vm298, 1, 0
    %v301 = vsel %vm299, 1, 0
    %v302 = vcvt.s32.f32 %v300
    %v303 = vcvt.s32.f32 %v301
    %v304 = vadd.s32 %v290, 2
    %v305 = vadd.s32 %v291, 2
    %vm306 = vcmp.ge.s32.totalorder %v304, 0
    %vm307 = vcmp.ge.s32.totalorder %v305, 0
    %vm308 = vcmp.lt.s32.totalorder %v304, 128
    %vm309 = vcmp.lt.s32.totalorder %v305, 128
    %vm310 = vmand %vm306, %vm308
    %vm311 = vmand %vm307, %vm309
    %v312 = vsel %vm310, 1, 0
    %v313 = vsel %vm311, 1, 0
    %v314 = vcvt.s32.f32 %v312
    %v315 = vcvt.s32.f32 %v313
    %316 = vrot.lane.b32.xlu0 %v257, 2
    %v317 = vpop.permute.xlu0 %316
    %318 = vrot.lane.b32.xlu0 %v258, 2
    %v319 = vpop.permute.xlu0 %318
    %vm320 = vcmp.lt.s32.totalorder %v266, 2
    %v321 = vsel %vm320, %v317, %v319
    %v322 = vsel %vm320, %v319, %v317
    %v323 = vmul.f32 %v322, %v302
    %v324 = vmul.f32 %v321, %v303
    %325 = vrot.lane.b32.xlu0 %v257, 126
    %v326 = vpop.permute.xlu0 %325
    %327 = vrot.lane.b32.xlu0 %v258, 126
    %v328 = vpop.permute.xlu0 %327
    %vm329 = vcmp.lt.s32.totalorder %v266, 126
    %v330 = vsel %vm329, %v326, %v328
    %v331 = vsel %vm329, %v328, %v326
    %v332 = vmul.f32 %v330, %v314
    %v333 = vmul.f32 %v331, %v315
    %v334 = vpack.c.bf16 %v257, %v323
    %v335 = vpack.c.bf16 %v258, %v324
    %v336 = vpack.c.bf16 %v332, %v332
    %v337 = vpack.c.bf16 %v333, %v333
    %v338 = vld [vmem:[%s2] sm:$0xf]
    %340 = vset.pattern.permute.xlu0 0
    %341 = vperm.xlu0 %340, %v38
    %v342 = vpop.permute.xlu0 %341
    %vm344 = vcmask 195584
    %v346 = vsel %vm344, %v338, 0
    %vm348 = vcmask 1043456
    %v350 = vsel %vm348, %v336, 0
    %v353 = vsel %vm348, %v337, 0
    %355 = vmatprep.subr.bf16.mxu0 %v335
    %356 = vmatpush1.bf16.msra.mxu0 %v334
    %357 = vmatprep.subr.bf16.mxu0 %v353
    %358 = vmatpush1.bf16.msra.mxu0 %v350
    %359 = vmatprep.subr.bf16.mxu0 0
    %360 = vmatpush1.bf16.msra.mxu0 0
    %361 = vmatprep.subr.bf16.mxu0 0
    %362 = vmatpush1.bf16.msra.mxu0 0
    %363 = vmatprep.subr.bf16.mxu0 0
    %364 = vmatpush1.bf16.msra.mxu0 0
    %365 = vmatprep.subr.bf16.mxu0 0
    %366 = vmatpush1.bf16.msra.mxu0 0
    %367 = vmatprep.subr.bf16.mxu0 0
    %368 = vmatpush1.bf16.msra.mxu0 0
    %369 = vmatprep.subr.bf16.mxu0 0
    %370 = vmatpush1.bf16.msra.mxu0 0
    %371 = vmatprep.subr.bf16.mxu0 0
    %372 = vmatpush1.bf16.msra.mxu0 0
    %373 = vmatprep.subr.bf16.mxu0 0
    %374 = vmatpush1.bf16.msra.mxu0 0
    %375 = vmatprep.subr.bf16.mxu0 0
    %376 = vmatpush1.bf16.msra.mxu0 0
    %377 = vmatprep.subr.bf16.mxu0 0
    %378 = vmatpush1.bf16.msra.mxu0 0
    %379 = vmatprep.subr.bf16.mxu0 0
    %380 = vmatpush1.bf16.msra.mxu0 0
    %381 = vmatprep.subr.bf16.mxu0 0
    %382 = vmatpush1.bf16.msra.mxu0 0
    %383 = vmatprep.subr.bf16.mxu0 0
    %384 = vmatpush1.bf16.msra.mxu0 0
    %385 = vmatprep.subr.bf16.mxu0 0
    %386 = vmatpush1.bf16.msra.mxu0 0
    %387 = vmatprep.mubr.bf16.mxu0 0
    %388 = vmatmul.mubr.bf16.gmra.mrb[0].mxu0 %v346
    %v389 = vpop.f32.mrb[0].mxu0
    %v390 = vadd.f32 %v342, %v389
    %v391 = vpop.f32.mrb[0].mxu0
    %v392 = vadd.f32 %v342, %v391
    %v393 = vpop.f32.mrb[0].mxu0
    %v394 = vpop.f32.mrb[0].mxu0
    %395 = vdwg.mxu0
    %v396 = vmax.f32 %v390, 0.0
    %v397 = vmax.f32 %v392, 0.0
    %v398 = vadd.f32 %v396, %v397
    %399 = vadd.xlane.f32.xlu0 %v398
    %v400 = vpop.xlane.xlu0 %399
    %v401 = vmul.f32 %v400, 0.00390625
    %v402 = vsub.f32 %v396, %v401
    %v403 = vsub.f32 %v397, %v401
    %v404 = vmul.f32 %v402, %v402
    %v405 = vmul.f32 %v403, %v403
    %v406 = vadd.f32 %v404, %v405
    %407 = vadd.xlane.f32.xlu0 %v406
    %v408 = vpop.xlane.xlu0 %407
    %v409 = vmul.f32 %v408, 0.00390625
    %v410 = vadd.f32 %v409, 1e-05
    %v411 = vrsqrt.pop %v410
    %v412 = vmul.f32 %v411, %v38
    %414 = vset.pattern.permute.xlu0 3
    %415 = vperm.xlu0 %414, %v412
    %v416 = vpop.permute.xlu0 %415
    %v418 = vmul.f32 %v402, %v416
    %v419 = vmul.f32 %v403, %v416
    %420 = vset.pattern.permute.xlu0 6
    %421 = vperm.xlu0 %420, %v38
    %v422 = vpop.permute.xlu0 %421
    %v424 = vadd.f32 %v418, %v422
    %v425 = vadd.f32 %v419, %v422
    %v426 = vadd.f32 %v424, %v259
    %v427 = vadd.f32 %v425, %v260
    %428 = vrot.lane.b32.xlu0 %v426, 2
    %v429 = vpop.permute.xlu0 %428
    %430 = vrot.lane.b32.xlu0 %v427, 2
    %v431 = vpop.permute.xlu0 %430
    %v432 = vsel %vm320, %v429, %v431
    %v433 = vsel %vm320, %v431, %v429
    %v434 = vmul.f32 %v433, %v302
    %v435 = vmul.f32 %v432, %v303
    %436 = vrot.lane.b32.xlu0 %v426, 126
    %v437 = vpop.permute.xlu0 %436
    %438 = vrot.lane.b32.xlu0 %v427, 126
    %v439 = vpop.permute.xlu0 %438
    %v440 = vsel %vm329, %v437, %v439
    %v441 = vsel %vm329, %v439, %v437
    %v442 = vmul.f32 %v440, %v314
    %v443 = vmul.f32 %v441, %v315
    %v444 = vpack.c.bf16 %v426, %v434
    %v445 = vpack.c.bf16 %v427, %v435
    %v446 = vpack.c.bf16 %v442, %v442
    %v447 = vpack.c.bf16 %v443, %v443
    %s448 = scalar_lea.vmem %s2, 4
    %v449 = vld [vmem:[%s448] sm:$0xf]
    %450 = vset.pattern.permute.xlu0 1
    %451 = vperm.xlu0 %450, %v38
    %v452 = vpop.permute.xlu0 %451
    %v455 = vsel %vm344, %v449, 0
    %v458 = vsel %vm348, %v446, 0
    %v461 = vsel %vm348, %v447, 0
    %463 = vmatprep.subr.bf16.mxu0 %v445
    %464 = vmatpush1.bf16.msra.mxu0 %v444
    %465 = vmatprep.subr.bf16.mxu0 %v461
    %466 = vmatpush1.bf16.msra.mxu0 %v458
    %467 = vmatprep.subr.bf16.mxu0 0
    %468 = vmatpush1.bf16.msra.mxu0 0
    %469 = vmatprep.subr.bf16.mxu0 0
    %470 = vmatpush1.bf16.msra.mxu0 0
    %471 = vmatprep.subr.bf16.mxu0 0
    %472 = vmatpush1.bf16.msra.mxu0 0
    %473 = vmatprep.subr.bf16.mxu0 0
    %474 = vmatpush1.bf16.msra.mxu0 0
    %475 = vmatprep.subr.bf16.mxu0 0
    %476 = vmatpush1.bf16.msra.mxu0 0
    %477 = vmatprep.subr.bf16.mxu0 0
    %478 = vmatpush1.bf16.msra.mxu0 0
    %479 = vmatprep.subr.bf16.mxu0 0
    %480 = vmatpush1.bf16.msra.mxu0 0
    %481 = vmatprep.subr.bf16.mxu0 0
    %482 = vmatpush1.bf16.msra.mxu0 0
    %483 = vmatprep.subr.bf16.mxu0 0
    %484 = vmatpush1.bf16.msra.mxu0 0
    %485 = vmatprep.subr.bf16.mxu0 0
    %486 = vmatpush1.bf16.msra.mxu0 0
    %487 = vmatprep.subr.bf16.mxu0 0
    %488 = vmatpush1.bf16.msra.mxu0 0
    %489 = vmatprep.subr.bf16.mxu0 0
    %490 = vmatpush1.bf16.msra.mxu0 0
    %491 = vmatprep.subr.bf16.mxu0 0
    %492 = vmatpush1.bf16.msra.mxu0 0
    %493 = vmatprep.subr.bf16.mxu0 0
    %494 = vmatpush1.bf16.msra.mxu0 0
    %495 = vmatprep.mubr.bf16.mxu0 0
    %496 = vmatmul.mubr.bf16.gmra.mrb[0].mxu0 %v455
    %v497 = vpop.f32.mrb[0].mxu0
    %v498 = vadd.f32 %v452, %v497
    %v499 = vpop.f32.mrb[0].mxu0
    %v500 = vadd.f32 %v452, %v499
    %v501 = vpop.f32.mrb[0].mxu0
    %v502 = vpop.f32.mrb[0].mxu0
    %503 = vdwg.mxu0
    %v504 = vmax.f32 %v498, 0.0
    %v505 = vmax.f32 %v500, 0.0
    %v506 = vadd.f32 %v504, %v505
    %507 = vadd.xlane.f32.xlu0 %v506
    %v508 = vpop.xlane.xlu0 %507
    %v509 = vmul.f32 %v508, 0.00390625
    %v510 = vsub.f32 %v504, %v509
    %v511 = vsub.f32 %v505, %v509
    %v512 = vmul.f32 %v510, %v510
    %v513 = vmul.f32 %v511, %v511
    %v514 = vadd.f32 %v512, %v513
    %515 = vadd.xlane.f32.xlu0 %v514
    %v516 = vpop.xlane.xlu0 %515
    %v517 = vmul.f32 %v516, 0.00390625
    %v518 = vadd.f32 %v517, 1e-05
    %v519 = vrsqrt.pop %v518
    %v520 = vmul.f32 %v519, %v38
    %522 = vset.pattern.permute.xlu0 4
    %523 = vperm.xlu0 %522, %v520
    %v524 = vpop.permute.xlu0 %523
    %v526 = vmul.f32 %v510, %v524
    %v527 = vmul.f32 %v511, %v524
    %528 = vset.pattern.permute.xlu0 7
    %529 = vperm.xlu0 %528, %v38
    %v530 = vpop.permute.xlu0 %529
    %v532 = vadd.f32 %v526, %v530
    %v533 = vadd.f32 %v527, %v530
    %v534 = vadd.f32 %v532, %v261
    %v535 = vadd.f32 %v533, %v262
    %536 = vrot.lane.b32.xlu0 %v534, 2
    %v537 = vpop.permute.xlu0 %536
    %538 = vrot.lane.b32.xlu0 %v535, 2
    %v539 = vpop.permute.xlu0 %538
    %v540 = vsel %vm320, %v537, %v539
    %v541 = vsel %vm320, %v539, %v537
    %v542 = vmul.f32 %v541, %v302
    %v543 = vmul.f32 %v540, %v303
    %544 = vrot.lane.b32.xlu0 %v534, 126
    %v545 = vpop.permute.xlu0 %544
    %546 = vrot.lane.b32.xlu0 %v535, 126
    %v547 = vpop.permute.xlu0 %546
    %v548 = vsel %vm329, %v545, %v547
    %v549 = vsel %vm329, %v547, %v545
    %v550 = vmul.f32 %v548, %v314
    %v551 = vmul.f32 %v549, %v315
    %v552 = vpack.c.bf16 %v534, %v542
    %v553 = vpack.c.bf16 %v535, %v543
    %v554 = vpack.c.bf16 %v550, %v550
    %v555 = vpack.c.bf16 %v551, %v551
    %s556 = scalar_lea.vmem %s2, 8
    %v557 = vld [vmem:[%s556] sm:$0xf]
    %558 = vset.pattern.permute.xlu0 2
    %559 = vperm.xlu0 %558, %v38
    %v560 = vpop.permute.xlu0 %559
    %v563 = vsel %vm344, %v557, 0
    %v566 = vsel %vm348, %v554, 0
    %v569 = vsel %vm348, %v555, 0
    %571 = vmatprep.subr.bf16.mxu0 %v553
    %572 = vmatpush1.bf16.msra.mxu0 %v552
    %573 = vmatprep.subr.bf16.mxu0 %v569
    %574 = vmatpush1.bf16.msra.mxu0 %v566
    %575 = vmatprep.subr.bf16.mxu0 0
    %576 = vmatpush1.bf16.msra.mxu0 0
    %577 = vmatprep.subr.bf16.mxu0 0
    %578 = vmatpush1.bf16.msra.mxu0 0
    %579 = vmatprep.subr.bf16.mxu0 0
    %580 = vmatpush1.bf16.msra.mxu0 0
    %581 = vmatprep.subr.bf16.mxu0 0
    %582 = vmatpush1.bf16.msra.mxu0 0
    %583 = vmatprep.subr.bf16.mxu0 0
    %584 = vmatpush1.bf16.msra.mxu0 0
    %585 = vmatprep.subr.bf16.mxu0 0
    %586 = vmatpush1.bf16.msra.mxu0 0
    %587 = vmatprep.subr.bf16.mxu0 0
    %588 = vmatpush1.bf16.msra.mxu0 0
    %589 = vmatprep.subr.bf16.mxu0 0
    %590 = vmatpush1.bf16.msra.mxu0 0
    %591 = vmatprep.subr.bf16.mxu0 0
    %592 = vmatpush1.bf16.msra.mxu0 0
    %593 = vmatprep.subr.bf16.mxu0 0
    %594 = vmatpush1.bf16.msra.mxu0 0
    %595 = vmatprep.subr.bf16.mxu0 0
    %596 = vmatpush1.bf16.msra.mxu0 0
    %597 = vmatprep.subr.bf16.mxu0 0
    %598 = vmatpush1.bf16.msra.mxu0 0
    %599 = vmatprep.subr.bf16.mxu0 0
    %600 = vmatpush1.bf16.msra.mxu0 0
    %601 = vmatprep.subr.bf16.mxu0 0
    %602 = vmatpush1.bf16.msra.mxu0 0
    %603 = vmatprep.mubr.bf16.mxu0 0
    %604 = vmatmul.mubr.bf16.gmra.mrb[0].mxu0 %v563
    %v605 = vpop.f32.mrb[0].mxu0
    %v606 = vadd.f32 %v560, %v605
    %v607 = vpop.f32.mrb[0].mxu0
    %v608 = vadd.f32 %v560, %v607
    %v609 = vpop.f32.mrb[0].mxu0
    %v610 = vpop.f32.mrb[0].mxu0
    %611 = vdwg.mxu0
    %v612 = vmax.f32 %v606, 0.0
    %v613 = vmax.f32 %v608, 0.0
    %v614 = vadd.f32 %v612, %v613
    %615 = vadd.xlane.f32.xlu0 %v614
    %v616 = vpop.xlane.xlu0 %615
    %v617 = vmul.f32 %v616, 0.00390625
    %v618 = vsub.f32 %v612, %v617
    %v619 = vsub.f32 %v613, %v617
    %v620 = vmul.f32 %v618, %v618
    %v621 = vmul.f32 %v619, %v619
    %v622 = vadd.f32 %v620, %v621
    %623 = vadd.xlane.f32.xlu0 %v622
    %v624 = vpop.xlane.xlu0 %623
    %v625 = vmul.f32 %v624, 0.00390625
    %v626 = vadd.f32 %v625, 1e-05
    %v627 = vrsqrt.pop %v626
    %v628 = vmul.f32 %v627, %v38
    %630 = vset.pattern.permute.xlu0 5
    %631 = vperm.xlu0 %630, %v628
    %v632 = vpop.permute.xlu0 %631
    %v634 = vmul.f32 %v618, %v632
    %v635 = vmul.f32 %v619, %v632
    %636 = vset.pattern.permute.xlu0 8
    %637 = vperm.xlu0 %636, %v38
    %v638 = vpop.permute.xlu0 %637
    %v640 = vadd.f32 %v634, %v638
    %v641 = vadd.f32 %v635, %v638
    %v642 = vpack.c.bf16 %v532, %v424
    %v643 = vpack.c.bf16 %v533, %v425
    %v644 = vpack.c.bf16 %v263, %v640
    %v645 = vpack.c.bf16 %v264, %v641
    %v646 = vld [vmem:[%s3] sm:$0xf]
    %v647 = vld [vmem:[%s3 + $0x4] sm:$0xf]
    %v648 = vld [vmem:[%s3 + $0x8] sm:$0xf]
    %v649 = vld [vmem:[%s3 + $0xc] sm:$0xf]
    %650 = vset.pattern.permute.xlu0 3
    %651 = vperm.xlu0 %650, %v34
    %v652 = vpop.permute.xlu0 %651
    %654 = vset.pattern.permute.xlu0 3
    %655 = vperm.xlu0 %654, %v35
    %v656 = vpop.permute.xlu0 %655
    %658 = vset.pattern.permute.xlu0 3
    %659 = vperm.xlu0 %658, %v36
    %v660 = vpop.permute.xlu0 %659
    %662 = vset.pattern.permute.xlu0 3
    %663 = vperm.xlu0 %662, %v37
    %v664 = vpop.permute.xlu0 %663
    %v670 = vunpack.c.l.b16 %v646
    %v671 = vunpack.c.l.b16 %v647
    %v672 = vunpack.c.l.b16 %v648
    %v673 = vunpack.c.l.b16 %v649
    %v674 = vpack.c.b16 %v671, %v670
    %v675 = vpack.c.b16 %v673, %v672
    %v677 = vsel %vm85, %v674, 0
    %v680 = vsel %vm85, %v675, 0
    %682 = vmatprep.subr.bf16.mxu0 %v643
    %683 = vmatpush1.bf16.msra.mxu0 %v642
    %684 = vmatprep.subr.bf16.mxu0 %v645
    %685 = vmatpush1.bf16.msra.mxu0 %v644
    %686 = vmatprep.subr.bf16.mxu0 0
    %687 = vmatpush1.bf16.msra.mxu0 0
    %688 = vmatprep.subr.bf16.mxu0 0
    %689 = vmatpush1.bf16.msra.mxu0 0
    %690 = vmatprep.subr.bf16.mxu0 0
    %691 = vmatpush1.bf16.msra.mxu0 0
    %692 = vmatprep.subr.bf16.mxu0 0
    %693 = vmatpush1.bf16.msra.mxu0 0
    %694 = vmatprep.subr.bf16.mxu0 0
    %695 = vmatpush1.bf16.msra.mxu0 0
    %696 = vmatprep.subr.bf16.mxu0 0
    %697 = vmatpush1.bf16.msra.mxu0 0
    %698 = vmatprep.subr.bf16.mxu0 0
    %699 = vmatpush1.bf16.msra.mxu0 0
    %700 = vmatprep.subr.bf16.mxu0 0
    %701 = vmatpush1.bf16.msra.mxu0 0
    %702 = vmatprep.subr.bf16.mxu0 0
    %703 = vmatpush1.bf16.msra.mxu0 0
    %704 = vmatprep.subr.bf16.mxu0 0
    %705 = vmatpush1.bf16.msra.mxu0 0
    %706 = vmatprep.subr.bf16.mxu0 0
    %707 = vmatpush1.bf16.msra.mxu0 0
    %708 = vmatprep.subr.bf16.mxu0 0
    %709 = vmatpush1.bf16.msra.mxu0 0
    %710 = vmatprep.subr.bf16.mxu0 0
    %711 = vmatpush1.bf16.msra.mxu0 0
    %712 = vmatprep.subr.bf16.mxu0 0
    %713 = vmatpush1.bf16.msra.mxu0 0
    %714 = vmatprep.mubr.bf16.mxu0 0
    %715 = vmatmul.mubr.bf16.gmra.mrb[0].mxu0 %v677
    %v716 = vpop.f32.mrb[0].mxu0
    %v717 = vadd.f32 %v652, %v716
    %v718 = vpop.f32.mrb[0].mxu0
    %v719 = vadd.f32 %v652, %v718
    %v720 = vpop.f32.mrb[0].mxu0
    %v721 = vadd.f32 %v656, %v720
    %v722 = vpop.f32.mrb[0].mxu0
    %v723 = vadd.f32 %v656, %v722
    %724 = vmatprep.mubr.bf16.mxu0 0
    %725 = vmatmul.mubr.bf16.gmra.mrb[0].mxu0 %v680
    %v726 = vpop.f32.mrb[0].mxu0
    %v727 = vadd.f32 %v660, %v726
    %v728 = vpop.f32.mrb[0].mxu0
    %v729 = vadd.f32 %v660, %v728
    %v730 = vpop.f32.mrb[0].mxu0
    %v731 = vadd.f32 %v664, %v730
    %v732 = vpop.f32.mrb[0].mxu0
    %v733 = vadd.f32 %v664, %v732
    %734 = vdwg.mxu0
    %v735 = vmax.f32 %v717, 0.0
    %v736 = vmax.f32 %v719, 0.0
    %v737 = vmax.f32 %v721, 0.0
    %v738 = vmax.f32 %v723, 0.0
    %v739 = vmax.f32 %v727, 0.0
    %v740 = vmax.f32 %v729, 0.0
    %v741 = vmax.f32 %v731, 0.0
    %v742 = vmax.f32 %v733, 0.0
    %v743 = vadd.f32 %v735, %v736
    %744 = vadd.xlane.f32.xlu0 %v743
    %v745 = vpop.xlane.xlu0 %744
    %v746 = vadd.f32 %v737, %v738
    %747 = vadd.xlane.f32.xlu0 %v746
    %v748 = vpop.xlane.xlu0 %747
    %v749 = vadd.f32 %v739, %v740
    %750 = vadd.xlane.f32.xlu0 %v749
    %v751 = vpop.xlane.xlu0 %750
    %v752 = vadd.f32 %v741, %v742
    %753 = vadd.xlane.f32.xlu0 %v752
    %v754 = vpop.xlane.xlu0 %753
    %v755 = vmul.f32 %v745, 0.00390625
    %v756 = vmul.f32 %v748, 0.00390625
    %v757 = vmul.f32 %v751, 0.00390625
    %v758 = vmul.f32 %v754, 0.00390625
    %v759 = vsub.f32 %v735, %v755
    %v760 = vsub.f32 %v736, %v755
    %v761 = vsub.f32 %v737, %v756
    %v762 = vsub.f32 %v738, %v756
    %v763 = vsub.f32 %v739, %v757
    %v764 = vsub.f32 %v740, %v757
    %v765 = vsub.f32 %v741, %v758
    %v766 = vsub.f32 %v742, %v758
    %v767 = vmul.f32 %v759, %v759
    %v768 = vmul.f32 %v760, %v760
    %v769 = vmul.f32 %v761, %v761
    %v770 = vmul.f32 %v762, %v762
    %v771 = vmul.f32 %v763, %v763
    %v772 = vmul.f32 %v764, %v764
    %v773 = vmul.f32 %v765, %v765
    %v774 = vmul.f32 %v766, %v766
    %v775 = vadd.f32 %v767, %v768
    %776 = vadd.xlane.f32.xlu0 %v775
    %v777 = vpop.xlane.xlu0 %776
    %v778 = vadd.f32 %v769, %v770
    %779 = vadd.xlane.f32.xlu0 %v778
    %v780 = vpop.xlane.xlu0 %779
    %v781 = vadd.f32 %v771, %v772
    %782 = vadd.xlane.f32.xlu0 %v781
    %v783 = vpop.xlane.xlu0 %782
    %v784 = vadd.f32 %v773, %v774
    %785 = vadd.xlane.f32.xlu0 %v784
    %v786 = vpop.xlane.xlu0 %785
    %v787 = vmul.f32 %v777, 0.00390625
    %v788 = vmul.f32 %v780, 0.00390625
    %v789 = vmul.f32 %v783, 0.00390625
    %v790 = vmul.f32 %v786, 0.00390625
    %v791 = vadd.f32 %v787, 1e-05
    %v792 = vadd.f32 %v788, 1e-05
    %v793 = vadd.f32 %v789, 1e-05
    %v794 = vadd.f32 %v790, 1e-05
    %v795 = vrsqrt.pop %v791
    %v796 = vrsqrt.pop %v792
    %v797 = vrsqrt.pop %v793
    %v798 = vrsqrt.pop %v794
    %v799 = vmul.f32 %v795, %v34
    %v800 = vmul.f32 %v796, %v35
    %v801 = vmul.f32 %v797, %v36
    %v802 = vmul.f32 %v798, %v37
    %804 = vset.pattern.permute.xlu0 4
    %805 = vperm.xlu0 %804, %v799
    %v806 = vpop.permute.xlu0 %805
    %809 = vset.pattern.permute.xlu0 4
    %810 = vperm.xlu0 %809, %v800
    %v811 = vpop.permute.xlu0 %810
    %814 = vset.pattern.permute.xlu0 4
    %815 = vperm.xlu0 %814, %v801
    %v816 = vpop.permute.xlu0 %815
    %819 = vset.pattern.permute.xlu0 4
    %820 = vperm.xlu0 %819, %v802
    %v821 = vpop.permute.xlu0 %820
    %v823 = vmul.f32 %v759, %v806
    %v824 = vmul.f32 %v760, %v806
    %v825 = vmul.f32 %v761, %v811
    %v826 = vmul.f32 %v762, %v811
    %v827 = vmul.f32 %v763, %v816
    %v828 = vmul.f32 %v764, %v816
    %v829 = vmul.f32 %v765, %v821
    %v830 = vmul.f32 %v766, %v821
    %831 = vset.pattern.permute.xlu0 5
    %832 = vperm.xlu0 %831, %v34
    %v833 = vpop.permute.xlu0 %832
    %835 = vset.pattern.permute.xlu0 5
    %836 = vperm.xlu0 %835, %v35
    %v837 = vpop.permute.xlu0 %836
    %839 = vset.pattern.permute.xlu0 5
    %840 = vperm.xlu0 %839, %v36
    %v841 = vpop.permute.xlu0 %840
    %843 = vset.pattern.permute.xlu0 5
    %844 = vperm.xlu0 %843, %v37
    %v845 = vpop.permute.xlu0 %844
    %v847 = vadd.f32 %v823, %v833
    %v848 = vadd.f32 %v824, %v833
    %v849 = vadd.f32 %v825, %v837
    %v850 = vadd.f32 %v826, %v837
    %v851 = vadd.f32 %v827, %v841
    %v852 = vadd.f32 %v828, %v841
    %v853 = vadd.f32 %v829, %v845
    %v854 = vadd.f32 %v830, %v845
    %855 = vadd.xlane.f32.xlu0 %v847
    %v856 = vpop.xlane.xlu0 %855
    %857 = vadd.xlane.f32.xlu0 %v849
    %v858 = vpop.xlane.xlu0 %857
    %859 = vadd.xlane.f32.xlu0 %v851
    %v860 = vpop.xlane.xlu0 %859
    %861 = vadd.xlane.f32.xlu0 %v853
    %v862 = vpop.xlane.xlu0 %861
    %v863 = vmul.f32 %v856, 0.0078125
    %v864 = vmul.f32 %v858, 0.0078125
    %v865 = vmul.f32 %v860, 0.0078125
    %v866 = vmul.f32 %v862, 0.0078125
    %867 = vadd.xlane.f32.xlu0 %v848
    %v868 = vpop.xlane.xlu0 %867
    %869 = vadd.xlane.f32.xlu0 %v850
    %v870 = vpop.xlane.xlu0 %869
    %871 = vadd.xlane.f32.xlu0 %v852
    %v872 = vpop.xlane.xlu0 %871
    %873 = vadd.xlane.f32.xlu0 %v854
    %v874 = vpop.xlane.xlu0 %873
    %v875 = vmul.f32 %v868, 0.0078125
    %v876 = vmul.f32 %v870, 0.0078125
    %v877 = vmul.f32 %v872, 0.0078125
    %v878 = vmul.f32 %v874, 0.0078125
    %vm879 = vcmask 7168
    %v880 = vsel %vm879, %v863, %v875
    %v881 = vsel %vm879, %v864, %v876
    %v882 = vsel %vm879, %v865, %v877
    %v883 = vsel %vm879, %v866, %v878
    %v884 = vld [vmem:[%s4] sm:$0xff]
    %v885 = vld [vmem:[%s4 + $0x8] sm:$0xff]
    %v886 = vld [vmem:[%s4 + $0x10] sm:$0xff]
    %v887 = vld [vmem:[%s4 + $0x18] sm:$0xff]
    %v888 = vld [vmem:[%s4 + $0x20] sm:$0xff]
    %v889 = vld [vmem:[%s4 + $0x28] sm:$0xff]
    %v890 = vld [vmem:[%s4 + $0x30] sm:$0xff]
    %v891 = vld [vmem:[%s4 + $0x38] sm:$0xff]
    %v892 = vld [vmem:[%s4 + $0x40] sm:$0xff]
    %v893 = vld [vmem:[%s4 + $0x48] sm:$0xff]
    %v894 = vld [vmem:[%s4 + $0x50] sm:$0xff]
    %v895 = vld [vmem:[%s4 + $0x58] sm:$0xff]
    %v896 = vld [vmem:[%s4 + $0x60] sm:$0xff]
    %v897 = vld [vmem:[%s4 + $0x68] sm:$0xff]
    %v898 = vld [vmem:[%s4 + $0x70] sm:$0xff]
    %v899 = vld [vmem:[%s4 + $0x78] sm:$0xff]
    %v900 = vld [vmem:[%s8] sm:$0xff]
    %v901 = vld [vmem:[%s8 + $0x8] sm:$0xff]
    %v902 = vld [vmem:[%s8 + $0x10] sm:$0xff]
    %v903 = vld [vmem:[%s8 + $0x18] sm:$0xff]
    %v904 = vld [vmem:[%s8 + $0x20] sm:$0xff]
    %v905 = vld [vmem:[%s8 + $0x28] sm:$0xff]
    %v906 = vld [vmem:[%s8 + $0x30] sm:$0xff]
    %v907 = vld [vmem:[%s8 + $0x38] sm:$0xff]
    %v908 = vld [vmem:[%s8 + $0x40] sm:$0xff]
    %v909 = vld [vmem:[%s8 + $0x48] sm:$0xff]
    %v910 = vld [vmem:[%s8 + $0x50] sm:$0xff]
    %v911 = vld [vmem:[%s8 + $0x58] sm:$0xff]
    %v912 = vld [vmem:[%s8 + $0x60] sm:$0xff]
    %v913 = vld [vmem:[%s8 + $0x68] sm:$0xff]
    %v914 = vld [vmem:[%s8 + $0x70] sm:$0xff]
    %v915 = vld [vmem:[%s8 + $0x78] sm:$0xff]
    %917 = vset.pattern.permute.xlu0 0
    %918 = vperm.xlu0 %917, %v900
    %v919 = vpop.permute.xlu0 %918
    %922 = vset.pattern.permute.xlu0 0
    %923 = vperm.xlu0 %922, %v901
    %v924 = vpop.permute.xlu0 %923
    %927 = vset.pattern.permute.xlu0 0
    %928 = vperm.xlu0 %927, %v902
    %v929 = vpop.permute.xlu0 %928
    %932 = vset.pattern.permute.xlu0 0
    %933 = vperm.xlu0 %932, %v903
    %v934 = vpop.permute.xlu0 %933
    %937 = vset.pattern.permute.xlu0 0
    %938 = vperm.xlu0 %937, %v904
    %v939 = vpop.permute.xlu0 %938
    %942 = vset.pattern.permute.xlu0 0
    %943 = vperm.xlu0 %942, %v905
    %v944 = vpop.permute.xlu0 %943
    %947 = vset.pattern.permute.xlu0 0
    %948 = vperm.xlu0 %947, %v906
    %v949 = vpop.permute.xlu0 %948
    %952 = vset.pattern.permute.xlu0 0
    %953 = vperm.xlu0 %952, %v907
    %v954 = vpop.permute.xlu0 %953
    %957 = vset.pattern.permute.xlu0 0
    %958 = vperm.xlu0 %957, %v908
    %v959 = vpop.permute.xlu0 %958
    %962 = vset.pattern.permute.xlu0 0
    %963 = vperm.xlu0 %962, %v909
    %v964 = vpop.permute.xlu0 %963
    %967 = vset.pattern.permute.xlu0 0
    %968 = vperm.xlu0 %967, %v910
    %v969 = vpop.permute.xlu0 %968
    %972 = vset.pattern.permute.xlu0 0
    %973 = vperm.xlu0 %972, %v911
    %v974 = vpop.permute.xlu0 %973
    %977 = vset.pattern.permute.xlu0 0
    %978 = vperm.xlu0 %977, %v912
    %v979 = vpop.permute.xlu0 %978
    %982 = vset.pattern.permute.xlu0 0
    %983 = vperm.xlu0 %982, %v913
    %v984 = vpop.permute.xlu0 %983
    %987 = vset.pattern.permute.xlu0 0
    %988 = vperm.xlu0 %987, %v914
    %v989 = vpop.permute.xlu0 %988
    %992 = vset.pattern.permute.xlu0 0
    %993 = vperm.xlu0 %992, %v915
    %v994 = vpop.permute.xlu0 %993
    %v997 = vsel %vm85, %v884, 0
    %v1000 = vsel %vm85, %v885, 0
    %v1003 = vsel %vm85, %v886, 0
    %v1006 = vsel %vm85, %v887, 0
    %v1009 = vsel %vm85, %v888, 0
    %v1012 = vsel %vm85, %v889, 0
    %v1015 = vsel %vm85, %v890, 0
    %v1018 = vsel %vm85, %v891, 0
    %v1021 = vsel %vm85, %v892, 0
    %v1024 = vsel %vm85, %v893, 0
    %v1027 = vsel %vm85, %v894, 0
    %v1030 = vsel %vm85, %v895, 0
    %v1033 = vsel %vm85, %v896, 0
    %v1036 = vsel %vm85, %v897, 0
    %v1039 = vsel %vm85, %v898, 0
    %v1042 = vsel %vm85, %v899, 0
    %1044 = vmatprep.subr.mxu0 0.0
    %1045 = vmatpush1.msra.mxu0 %v880
    %1046 = vmatprep.subr.mxu0 0.0
    %1047 = vmatpush1.msra.mxu0 %v881
    %1048 = vmatprep.subr.mxu0 0.0
    %1049 = vmatpush1.msra.mxu0 %v882
    %1050 = vmatprep.subr.mxu0 0.0
    %1051 = vmatpush1.msra.mxu0 %v883
    %1052 = vmatprep.subr.mxu0 0.0
    %1053 = vmatpush1.msra.mxu0 0.0
    %1054 = vmatprep.subr.mxu0 0.0
    %1055 = vmatpush1.msra.mxu0 0.0
    %1056 = vmatprep.subr.mxu0 0.0
    %1057 = vmatpush1.msra.mxu0 0.0
    %1058 = vmatprep.subr.mxu0 0.0
    %1059 = vmatpush1.msra.mxu0 0.0
    %1060 = vmatprep.subr.mxu0 0.0
    %1061 = vmatpush1.msra.mxu0 0.0
    %1062 = vmatprep.subr.mxu0 0.0
    %1063 = vmatpush1.msra.mxu0 0.0
    %1064 = vmatprep.subr.mxu0 0.0
    %1065 = vmatpush1.msra.mxu0 0.0
    %1066 = vmatprep.subr.mxu0 0.0
    %1067 = vmatpush1.msra.mxu0 0.0
    %1068 = vmatprep.subr.mxu0 0.0
    %1069 = vmatpush1.msra.mxu0 0.0
    %1070 = vmatprep.subr.mxu0 0.0
    %1071 = vmatpush1.msra.mxu0 0.0
    %1072 = vmatprep.subr.mxu0 0.0
    %1073 = vmatpush1.msra.mxu0 0.0
    %1074 = vmatprep.subr.mxu0 0.0
    %1075 = vmatpush1.msra.mxu0 0.0
    %1076 = vmatprep.subr.mxu0 0.0
    %1077 = vmatpush1.msra.mxu0 0.0
    %1078 = vmatprep.subr.mxu0 0.0
    %1079 = vmatpush1.msra.mxu0 0.0
    %1080 = vmatprep.subr.mxu0 0.0
    %1081 = vmatpush1.msra.mxu0 0.0
    %1082 = vmatprep.subr.mxu0 0.0
    %1083 = vmatpush1.msra.mxu0 0.0
    %1084 = vmatprep.subr.mxu0 0.0
    %1085 = vmatpush1.msra.mxu0 0.0
    %1086 = vmatprep.subr.mxu0 0.0
    %1087 = vmatpush1.msra.mxu0 0.0
    %1088 = vmatprep.subr.mxu0 0.0
    %1089 = vmatpush1.msra.mxu0 0.0
    %1090 = vmatprep.subr.mxu0 0.0
    %1091 = vmatpush1.msra.mxu0 0.0
    %1092 = vmatprep.subr.mxu0 0.0
    %1093 = vmatpush1.msra.mxu0 0.0
    %1094 = vmatprep.subr.mxu0 0.0
    %1095 = vmatpush1.msra.mxu0 0.0
    %1096 = vmatprep.subr.mxu0 0.0
    %1097 = vmatpush1.msra.mxu0 0.0
    %1098 = vmatprep.subr.mxu0 0.0
    %1099 = vmatpush1.msra.mxu0 0.0
    %1100 = vmatprep.subr.mxu0 0.0
    %1101 = vmatpush1.msra.mxu0 0.0
    %1102 = vmatprep.subr.mxu0 0.0
    %1103 = vmatpush1.msra.mxu0 0.0
    %1104 = vmatprep.subr.mxu0 0.0
    %1105 = vmatpush1.msra.mxu0 0.0
    %1106 = vmatprep.subr.mxu0 0.0
    %1107 = vmatpush1.msra.mxu0 0.0
    %1108 = vmatprep.mubr.f32.mxu0 0.0
    %1109 = vmatmul.mubr.f32.gmra.mrb[0].mxu0 %v997
    %v1110 = vpop.f32.mrb[0].mxu0
    %v1111 = vadd.f32 %v919, %v1110
    %v1112 = vpop.f32.mrb[0].mxu0
    %1113 = vmatprep.mubr.f32.mxu0 0.0
    %1114 = vmatmul.mubr.f32.gmra.mrb[0].mxu0 %v1000
    %v1115 = vpop.f32.mrb[0].mxu0
    %v1116 = vadd.f32 %v924, %v1115
    %v1117 = vpop.f32.mrb[0].mxu0
    %1118 = vmatprep.mubr.f32.mxu0 0.0
    %1119 = vmatmul.mubr.f32.gmra.mrb[0].mxu0 %v1003
    %v1120 = vpop.f32.mrb[0].mxu0
    %v1121 = vadd.f32 %v929, %v1120
    %v1122 = vpop.f32.mrb[0].mxu0
    %1123 = vmatprep.mubr.f32.mxu0 0.0
    %1124 = vmatmul.mubr.f32.gmra.mrb[0].mxu0 %v1006
    %v1125 = vpop.f32.mrb[0].mxu0
    %v1126 = vadd.f32 %v934, %v1125
    %v1127 = vpop.f32.mrb[0].mxu0
    %1128 = vmatprep.mubr.f32.mxu0 0.0
    %1129 = vmatmul.mubr.f32.gmra.mrb[0].mxu0 %v1009
    %v1130 = vpop.f32.mrb[0].mxu0
    %v1131 = vadd.f32 %v939, %v1130
    %v1132 = vpop.f32.mrb[0].mxu0
    %1133 = vmatprep.mubr.f32.mxu0 0.0
    %1134 = vmatmul.mubr.f32.gmra.mrb[0].mxu0 %v1012
    %v1135 = vpop.f32.mrb[0].mxu0
    %v1136 = vadd.f32 %v944, %v1135
    %v1137 = vpop.f32.mrb[0].mxu0
    %1138 = vmatprep.mubr.f32.mxu0 0.0
    %1139 = vmatmul.mubr.f32.gmra.mrb[0].mxu0 %v1015
    %v1140 = vpop.f32.mrb[0].mxu0
    %v1141 = vadd.f32 %v949, %v1140
    %v1142 = vpop.f32.mrb[0].mxu0
    %1143 = vmatprep.mubr.f32.mxu0 0.0
    %1144 = vmatmul.mubr.f32.gmra.mrb[0].mxu0 %v1018
    %v1145 = vpop.f32.mrb[0].mxu0
    %v1146 = vadd.f32 %v954, %v1145
    %v1147 = vpop.f32.mrb[0].mxu0
    %1148 = vmatprep.mubr.f32.mxu0 0.0
    %1149 = vmatmul.mubr.f32.gmra.mrb[0].mxu0 %v1021
    %v1150 = vpop.f32.mrb[0].mxu0
    %v1151 = vadd.f32 %v959, %v1150
    %v1152 = vpop.f32.mrb[0].mxu0
    %1153 = vmatprep.mubr.f32.mxu0 0.0
    %1154 = vmatmul.mubr.f32.gmra.mrb[0].mxu0 %v1024
    %v1155 = vpop.f32.mrb[0].mxu0
    %v1156 = vadd.f32 %v964, %v1155
    %v1157 = vpop.f32.mrb[0].mxu0
    %1158 = vmatprep.mubr.f32.mxu0 0.0
    %1159 = vmatmul.mubr.f32.gmra.mrb[0].mxu0 %v1027
    %v1160 = vpop.f32.mrb[0].mxu0
    %v1161 = vadd.f32 %v969, %v1160
    %v1162 = vpop.f32.mrb[0].mxu0
    %1163 = vmatprep.mubr.f32.mxu0 0.0
    %1164 = vmatmul.mubr.f32.gmra.mrb[0].mxu0 %v1030
    %v1165 = vpop.f32.mrb[0].mxu0
    %v1166 = vadd.f32 %v974, %v1165
    %v1167 = vpop.f32.mrb[0].mxu0
    %1168 = vmatprep.mubr.f32.mxu0 0.0
    %1169 = vmatmul.mubr.f32.gmra.mrb[0].mxu0 %v1033
    %v1170 = vpop.f32.mrb[0].mxu0
    %v1171 = vadd.f32 %v979, %v1170
    %v1172 = vpop.f32.mrb[0].mxu0
    %1173 = vmatprep.mubr.f32.mxu0 0.0
    %1174 = vmatmul.mubr.f32.gmra.mrb[0].mxu0 %v1036
    %v1175 = vpop.f32.mrb[0].mxu0
    %v1176 = vadd.f32 %v984, %v1175
    %v1177 = vpop.f32.mrb[0].mxu0
    %1178 = vmatprep.mubr.f32.mxu0 0.0
    %1179 = vmatmul.mubr.f32.gmra.mrb[0].mxu0 %v1039
    %v1180 = vpop.f32.mrb[0].mxu0
    %v1181 = vadd.f32 %v989, %v1180
    %v1182 = vpop.f32.mrb[0].mxu0
    %1183 = vmatprep.mubr.f32.mxu0 0.0
    %1184 = vmatmul.mubr.f32.gmra.mrb[0].mxu0 %v1042
    %v1185 = vpop.f32.mrb[0].mxu0
    %v1186 = vadd.f32 %v994, %v1185
    %v1187 = vpop.f32.mrb[0].mxu0
    %1188 = vdwg.mxu0
    %v1189 = vmax.f32 %v1111, 0.0
    %v1190 = vmax.f32 %v1116, 0.0
    %v1191 = vmax.f32 %v1121, 0.0
    %v1192 = vmax.f32 %v1126, 0.0
    %v1193 = vmax.f32 %v1131, 0.0
    %v1194 = vmax.f32 %v1136, 0.0
    %v1195 = vmax.f32 %v1141, 0.0
    %v1196 = vmax.f32 %v1146, 0.0
    %v1197 = vmax.f32 %v1151, 0.0
    %v1198 = vmax.f32 %v1156, 0.0
    %v1199 = vmax.f32 %v1161, 0.0
    %v1200 = vmax.f32 %v1166, 0.0
    %v1201 = vmax.f32 %v1171, 0.0
    %v1202 = vmax.f32 %v1176, 0.0
    %v1203 = vmax.f32 %v1181, 0.0
    %v1204 = vmax.f32 %v1186, 0.0
    %v1205 = vld [vmem:[%s5] sm:$0xff]
    %v1206 = vld [vmem:[%s5 + $0x8] sm:$0xff]
    %v1207 = vld [vmem:[%s5 + $0x10] sm:$0xff]
    %v1208 = vld [vmem:[%s5 + $0x18] sm:$0xff]
    %1209 = vset.pattern.permute.xlu0 6
    %1210 = vperm.xlu0 %1209, %v34
    %v1211 = vpop.permute.xlu0 %1210
    %1213 = vset.pattern.permute.xlu0 6
    %1214 = vperm.xlu0 %1213, %v35
    %v1215 = vpop.permute.xlu0 %1214
    %1217 = vset.pattern.permute.xlu0 6
    %1218 = vperm.xlu0 %1217, %v36
    %v1219 = vpop.permute.xlu0 %1218
    %1221 = vset.pattern.permute.xlu0 6
    %1222 = vperm.xlu0 %1221, %v37
    %v1223 = vpop.permute.xlu0 %1222
    %1225 = vmatprep.subr.mxu0 0.0
    %1226 = vmatpush1.msra.mxu0 %v1189
    %1227 = vmatprep.subr.mxu0 0.0
    %1228 = vmatpush1.msra.mxu0 %v1190
    %1229 = vmatprep.subr.mxu0 0.0
    %1230 = vmatpush1.msra.mxu0 %v1191
    %1231 = vmatprep.subr.mxu0 0.0
    %1232 = vmatpush1.msra.mxu0 %v1192
    %1233 = vmatprep.subr.mxu0 0.0
    %1234 = vmatpush1.msra.mxu0 %v1193
    %1235 = vmatprep.subr.mxu0 0.0
    %1236 = vmatpush1.msra.mxu0 %v1194
    %1237 = vmatprep.subr.mxu0 0.0
    %1238 = vmatpush1.msra.mxu0 %v1195
    %1239 = vmatprep.subr.mxu0 0.0
    %1240 = vmatpush1.msra.mxu0 %v1196
    %1241 = vmatprep.subr.mxu0 0.0
    %1242 = vmatpush1.msra.mxu0 %v1197
    %1243 = vmatprep.subr.mxu0 0.0
    %1244 = vmatpush1.msra.mxu0 %v1198
    %1245 = vmatprep.subr.mxu0 0.0
    %1246 = vmatpush1.msra.mxu0 %v1199
    %1247 = vmatprep.subr.mxu0 0.0
    %1248 = vmatpush1.msra.mxu0 %v1200
    %1249 = vmatprep.subr.mxu0 0.0
    %1250 = vmatpush1.msra.mxu0 %v1201
    %1251 = vmatprep.subr.mxu0 0.0
    %1252 = vmatpush1.msra.mxu0 %v1202
    %1253 = vmatprep.subr.mxu0 0.0
    %1254 = vmatpush1.msra.mxu0 %v1203
    %1255 = vmatprep.subr.mxu0 0.0
    %1256 = vmatpush1.msra.mxu0 %v1204
    %1257 = vmatprep.subr.mxu0 0.0
    %1258 = vmatpush1.msra.mxu0 0.0
    %1259 = vmatprep.subr.mxu0 0.0
    %1260 = vmatpush1.msra.mxu0 0.0
    %1261 = vmatprep.subr.mxu0 0.0
    %1262 = vmatpush1.msra.mxu0 0.0
    %1263 = vmatprep.subr.mxu0 0.0
    %1264 = vmatpush1.msra.mxu0 0.0
    %1265 = vmatprep.subr.mxu0 0.0
    %1266 = vmatpush1.msra.mxu0 0.0
    %1267 = vmatprep.subr.mxu0 0.0
    %1268 = vmatpush1.msra.mxu0 0.0
    %1269 = vmatprep.subr.mxu0 0.0
    %1270 = vmatpush1.msra.mxu0 0.0
    %1271 = vmatprep.subr.mxu0 0.0
    %1272 = vmatpush1.msra.mxu0 0.0
    %1273 = vmatprep.subr.mxu0 0.0
    %1274 = vmatpush1.msra.mxu0 0.0
    %1275 = vmatprep.subr.mxu0 0.0
    %1276 = vmatpush1.msra.mxu0 0.0
    %1277 = vmatprep.subr.mxu0 0.0
    %1278 = vmatpush1.msra.mxu0 0.0
    %1279 = vmatprep.subr.mxu0 0.0
    %1280 = vmatpush1.msra.mxu0 0.0
    %1281 = vmatprep.subr.mxu0 0.0
    %1282 = vmatpush1.msra.mxu0 0.0
    %1283 = vmatprep.subr.mxu0 0.0
    %1284 = vmatpush1.msra.mxu0 0.0
    %1285 = vmatprep.subr.mxu0 0.0
    %1286 = vmatpush1.msra.mxu0 0.0
    %1287 = vmatprep.subr.mxu0 0.0
    %1288 = vmatpush1.msra.mxu0 0.0
    %1289 = vmatprep.mubr.f32.mxu0 0.0
    %1290 = vmatmul.mubr.f32.gmra.mrb[0].mxu0 %v1205
    %v1291 = vpop.f32.mrb[0].mxu0
    %v1292 = vadd.f32 %v1211, %v1291
    %v1293 = vpop.f32.mrb[0].mxu0
    %1294 = vmatprep.mubr.f32.mxu0 0.0
    %1295 = vmatmul.mubr.f32.gmra.mrb[0].mxu0 %v1206
    %v1296 = vpop.f32.mrb[0].mxu0
    %v1297 = vadd.f32 %v1215, %v1296
    %v1298 = vpop.f32.mrb[0].mxu0
    %1299 = vmatprep.mubr.f32.mxu0 0.0
    %1300 = vmatmul.mubr.f32.gmra.mrb[0].mxu0 %v1207
    %v1301 = vpop.f32.mrb[0].mxu0
    %v1302 = vadd.f32 %v1219, %v1301
    %v1303 = vpop.f32.mrb[0].mxu0
    %1304 = vmatprep.mubr.f32.mxu0 0.0
    %1305 = vmatmul.mubr.f32.gmra.mrb[0].mxu0 %v1208
    %v1306 = vpop.f32.mrb[0].mxu0
    %v1307 = vadd.f32 %v1223, %v1306
    %v1308 = vpop.f32.mrb[0].mxu0
    %1309 = vdwg.mxu0
    %v1310 = vxor.u32 %v1292, 2147483648
    %v1311 = vxor.u32 %v1297, 2147483648
    %v1312 = vxor.u32 %v1302, 2147483648
    %v1313 = vxor.u32 %v1307, 2147483648
    %v1314 = vmul.f32 %v1310, 1.442695
    %v1315 = vpow.pop %v1314
    %v1316 = vmul.f32 %v1311, 1.442695
    %v1317 = vpow.pop %v1316
    %v1318 = vmul.f32 %v1312, 1.442695
    %v1319 = vpow.pop %v1318
    %v1320 = vmul.f32 %v1313, 1.442695
    %v1321 = vpow.pop %v1320
    %v1322 = vadd.f32 %v1315, 1.0
    %v1323 = vadd.f32 %v1317, 1.0
    %v1324 = vadd.f32 %v1319, 1.0
    %v1325 = vadd.f32 %v1321, 1.0
    %v1326 = vrcp.pop %v1322
    %v1327 = vmul.f32 1.0, %v1326
    %v1328 = vrcp.pop %v1323
    %v1329 = vmul.f32 1.0, %v1328
    %v1330 = vrcp.pop %v1324
    %v1331 = vmul.f32 1.0, %v1330
    %v1332 = vrcp.pop %v1325
    %v1333 = vmul.f32 1.0, %v1332
    %1335 = vset.pattern.permute.xlu0 0
    %1336 = vperm.xlu0 %1335, %v1327
    %v1337 = vpop.permute.xlu0 %1336
    %1340 = vset.pattern.permute.xlu0 0
    %1341 = vperm.xlu0 %1340, %v1329
    %v1342 = vpop.permute.xlu0 %1341
    %1345 = vset.pattern.permute.xlu0 0
    %1346 = vperm.xlu0 %1345, %v1331
    %v1347 = vpop.permute.xlu0 %1346
    %1350 = vset.pattern.permute.xlu0 0
    %1351 = vperm.xlu0 %1350, %v1333
    %v1352 = vpop.permute.xlu0 %1351
    %v1354 = vmul.f32 %v847, %v1337
    %v1355 = vmul.f32 %v849, %v1342
    %v1356 = vmul.f32 %v851, %v1347
    %v1357 = vmul.f32 %v853, %v1352
    %v1358 = vadd.f32 %v1354, %v39
    %v1359 = vadd.f32 %v1355, %v41
    %v1360 = vadd.f32 %v1356, %v43
    %v1361 = vadd.f32 %v1357, %v45
    %1362 = vst [vmem:[#allocation2] sm:$0xff] %v1358
    %1363 = vst [vmem:[#allocation2 + $0x8] sm:$0xff] %v1359
    %1364 = vst [vmem:[#allocation2 + $0x10] sm:$0xff] %v1360
    %1365 = vst [vmem:[#allocation2 + $0x18] sm:$0xff] %v1361
    %1366 = vset.pattern.permute.xlu0 1
    %1367 = vperm.xlu0 %1366, %v1327
    %v1368 = vpop.permute.xlu0 %1367
    %1370 = vset.pattern.permute.xlu0 1
    %1371 = vperm.xlu0 %1370, %v1329
    %v1372 = vpop.permute.xlu0 %1371
    %1374 = vset.pattern.permute.xlu0 1
    %1375 = vperm.xlu0 %1374, %v1331
    %v1376 = vpop.permute.xlu0 %1375
    %1378 = vset.pattern.permute.xlu0 1
    %1379 = vperm.xlu0 %1378, %v1333
    %v1380 = vpop.permute.xlu0 %1379
    %v1382 = vmul.f32 %v848, %v1368
    %v1383 = vmul.f32 %v850, %v1372
    %v1384 = vmul.f32 %v852, %v1376
    %v1385 = vmul.f32 %v854, %v1380
    %v1386 = vadd.f32 %v1382, %v40
    %v1387 = vadd.f32 %v1383, %v42
    %v1388 = vadd.f32 %v1384, %v44
    %v1389 = vadd.f32 %v1385, %v46
    %s1390 = scalar_lea.vmem [#allocation2], 32
    %1391 = vst [vmem:[%s1390] sm:$0xff] %v1386
    %1392 = vst [vmem:[%s1390 + $0x8] sm:$0xff] %v1387
    %1393 = vst [vmem:[%s1390 + $0x10] sm:$0xff] %v1388
    %1394 = vst [vmem:[%s1390 + $0x18] sm:$0xff] %v1389
    // Predicated region
    $region38: #{bottle2neck_forward.1} parent=1 // pred_check
      _
    $region39: #{bottle2neck_forward.1} parent=1 // pred_check_branch
      %1396 = sbr.rel (0) target = $region41
    $region40: #{bottle2neck_forward.1} parent=1 // pred_region
      %s1398 = ssub.s32 1024, 1024
      %1399 = vsyncadd [#allocation3], %s1398
      %s1400 = sshll.u32 [#allocation2], 4
      %s1401 = int_to_ptr.vmem [resolvable:$true] %s1400
      %1406 = dma.vmem_to_hbm [thread:$0]  %s1401, 1024, %s9, [#allocation3], 128, 128, 8
    $region41: #{bottle2neck_forward.1} parent=1 // pred_fallthru
      _
    // Predicated region
    $region42: #{bottle2neck_forward.1} parent=1 // pred_check
      _
    $region43: #{bottle2neck_forward.1} parent=1 // pred_check_branch
      %1408 = sbr.rel (0) target = $region45
    $region44: #{bottle2neck_forward.1} parent=1 // pred_region
      %1409 = dma.done [#allocation3], 1024
    $region45: #{bottle2neck_forward.1} parent=1 // pred_fallthru
      _
    %1410 = vsyncpa [#allocation3], 1

</llo_original>
